<compile_context>
chip_gen: v7x
topology: tpu7x:2x2x1
jax: 0.10.0
libtpu: 0.0.40
codegen_flags: <defaults>
</compile_context>

<pallas_src>
import functools

import numpy as np
import jax
import jax.numpy as jnp
from jax.experimental import pallas as pl
from jax.experimental.pallas import tpu as pltpu


def _halo_masks(H, W):
    """(9, 1, H*W) 0/1 masks: mask[t] marks output pixels whose 3x3 tap t
    reads a source pixel inside the image (implements the zero padding)."""
    masks = np.zeros((9, 1, H * W), np.float32)
    for dy in range(3):
        for dx in range(3):
            dh, dw = dy - 1, dx - 1
            m = np.zeros((H, W), np.float32)
            m[max(0, -dh):min(H, H - dh), max(0, -dw):min(W, W - dw)] = 1.0
            masks[dy * 3 + dx, 0, :] = m.reshape(-1)
    return jnp.asarray(masks)


def _conv3x3_taps(v, w_ref, mask_ref, H, W):
    """3x3 'same' conv of v: (Cin, H*W) with w_ref: (3, 3, Cout, Cin).

    Returns an f32 (Cout, H*W) accumulator (9 lane-dense MXU matmuls)."""
    P = H * W
    cout = w_ref.shape[2]
    acc = jnp.zeros((cout, P), jnp.float32)
    for dy in range(3):
        for dx in range(3):
            dh, dw = dy - 1, dx - 1
            xs = v
            if dh or dw:
                # xs[p] = v[p + dh*W + dw]  (circular lane rotation) ...
                xs = pltpu.roll(xs, shift=(-(dh * W + dw)) % P, axis=1)
                # ... then zero positions whose source fell outside the image.
                xs = xs * mask_ref[dy * 3 + dx]          # (1, P) broadcast
            acc = acc + jnp.dot(w_ref[dy, dx], xs,       # (Cout,Cin)x(Cin,P)
                                preferred_element_type=jnp.float32)
    return acc


def _double_conv_kernel(mask_ref, x_ref, w1_ref, s1_ref, b1_ref,
                        w2_ref, s2_ref, b2_ref, o_ref, *, H, W):
    # x_ref: (1, Cin, H*W)   one batch element, flat spatial, lane-dense
    # wN_ref: (3, 3, CoutN, CinN)   per-tap weight matrices
    # sN/bN_ref: (CoutN, 1)  folded BatchNorm scale/bias (lane broadcast)
    # o_ref: (1, Cout, H*W)
    x = x_ref[0]                                      # (Cin, H*W)
    y = _conv3x3_taps(x, w1_ref, mask_ref, H, W)      # (Cmid, H*W)
    y = jnp.maximum(y * s1_ref[...] + b1_ref[...], 0.0)
    y = _conv3x3_taps(y, w2_ref, mask_ref, H, W)      # (Cout, H*W)
    y = jnp.maximum(y * s2_ref[...] + b2_ref[...], 0.0)
    o_ref[0] = y.astype(o_ref.dtype)                  # single lane-dense store


def double_conv(x_nchw, params, eps=1e-5):
    """PyTorch-equivalent DoubleConv forward.  x_nchw: (N, Cin, H, W)."""
    N, Cin, H, W = x_nchw.shape
    Cmid = params["w1"].shape[0]
    Cout = params["w2"].shape[0]
    P = H * W

    x_flat = x_nchw.reshape(N, Cin, P)                # NCHW -> (N, C, H*W), free

    # Per-tap weight matrices: OIHW -> (KH, KW, Cout, Cin).
    w1 = jnp.transpose(params["w1"], (2, 3, 0, 1))
    w2 = jnp.transpose(params["w2"], (2, 3, 0, 1))

    # Folded inference BatchNorm affine, shaped (C, 1) for lane broadcast.
    s1 = params["gamma1"] / jnp.sqrt(params["var1"] + eps)
    b1 = params["beta1"] - params["mean1"] * s1
    s2 = params["gamma2"] / jnp.sqrt(params["var2"] + eps)
    b2 = params["beta2"] - params["mean2"] * s2

    masks = _halo_masks(H, W)

    kernel = functools.partial(_double_conv_kernel, H=H, W=W)
    out = pl.pallas_call(
        kernel,
        out_shape=jax.ShapeDtypeStruct((N, Cout, P), jnp.float32),
        grid_spec=pltpu.PrefetchScalarGridSpec(
            num_scalar_prefetch=0,
            grid=(N,),
            in_specs=[
                pl.BlockSpec((9, 1, P), lambda n: (0, 0, 0)),            # masks
                pl.BlockSpec((1, Cin, P), lambda n: (n, 0, 0)),          # x
                pl.BlockSpec((3, 3, Cmid, Cin), lambda n: (0, 0, 0, 0)), # w1
                pl.BlockSpec((Cmid, 1), lambda n: (0, 0)),               # s1
                pl.BlockSpec((Cmid, 1), lambda n: (0, 0)),               # b1
                pl.BlockSpec((3, 3, Cout, Cmid), lambda n: (0, 0, 0, 0)),# w2
                pl.BlockSpec((Cout, 1), lambda n: (0, 0)),               # s2
                pl.BlockSpec((Cout, 1), lambda n: (0, 0)),               # b2
            ],
            out_specs=pl.BlockSpec((1, Cout, P), lambda n: (n, 0, 0)),
        ),
        compiler_params=pltpu.CompilerParams(
            dimension_semantics=("parallel",)),
    )(masks, x_flat, w1, s1[:, None], b1[:, None],
      w2, s2[:, None], b2[:, None])

    return out.reshape(N, Cout, H, W)


def _ref_block(x, w, gamma, beta, mean, var, eps=1e-5):
    """Plain-JAX reference: conv3x3 + inference BN + ReLU in NCHW."""
    y = jax.lax.conv_general_dilated(
        x, w, window_strides=(1, 1), padding=((1, 1), (1, 1)),
        dimension_numbers=("NCHW", "OIHW", "NCHW"))
    s = gamma / jnp.sqrt(var + eps)
    y = y * s[None, :, None, None] + (beta - mean * s)[None, :, None, None]
    return jnp.maximum(y, 0.0)


if __name__ == "__main__":
    N, Cin, H, W = 2, 4, 16, 16
    Cout = 8

    key = jax.random.PRNGKey(0)
    ks = jax.random.split(key, 11)
    x = jax.random.normal(ks[0], (N, Cin, H, W), jnp.float32)
    params = dict(
        w1=jax.random.normal(ks[1], (Cout, Cin, 3, 3), jnp.float32) * 0.1,
        gamma1=jax.random.uniform(ks[2], (Cout,), jnp.float32, 0.5, 1.5),
        beta1=jax.random.normal(ks[3], (Cout,), jnp.float32) * 0.1,
        mean1=jax.random.normal(ks[4], (Cout,), jnp.float32) * 0.1,
        var1=jax.random.uniform(ks[5], (Cout,), jnp.float32, 0.5, 1.5),
        w2=jax.random.normal(ks[6], (Cout, Cout, 3, 3), jnp.float32) * 0.1,
        gamma2=jax.random.uniform(ks[7], (Cout,), jnp.float32, 0.5, 1.5),
        beta2=jax.random.normal(ks[8], (Cout,), jnp.float32) * 0.1,
        mean2=jax.random.normal(ks[9], (Cout,), jnp.float32) * 0.1,
        var2=jax.random.uniform(ks[10], (Cout,), jnp.float32, 0.5, 1.5),
    )

    out = jax.block_until_ready(double_conv(x, params))

    # Sanity check against a plain-JAX reference (f32; tolerance covers the
    # different accumulation order of the fused per-tap matmuls).
    ref = _ref_block(x, params["w1"], params["gamma1"], params["beta1"],
                     params["mean1"], params["var1"])
    ref = _ref_block(ref, params["w2"], params["gamma2"], params["beta2"],
                     params["mean2"], params["var2"])

    assert out.shape == (N, Cout, H, W)
    assert out.dtype == jnp.float32
    assert jnp.allclose(out, ref, atol=1e-3, rtol=1e-3), (
        float(jnp.max(jnp.abs(out - ref))))
    print("KERNEL_OK")
</pallas_src>

<mosaic_0001>
module attributes {stable_mosaic.version = 11 : i64} {
  func.func @_double_conv_kernel(%arg0: i32, %arg1: memref<9x1x256xf32, #tpu.memory_space<vmem>>, %arg2: memref<1x4x256xf32, #tpu.memory_space<vmem>>, %arg3: memref<3x3x8x4xf32, #tpu.memory_space<vmem>>, %arg4: memref<8x1xf32, #tpu.memory_space<vmem>>, %arg5: memref<8x1xf32, #tpu.memory_space<vmem>>, %arg6: memref<3x3x8x8xf32, #tpu.memory_space<vmem>>, %arg7: memref<8x1xf32, #tpu.memory_space<vmem>>, %arg8: memref<8x1xf32, #tpu.memory_space<vmem>>, %arg9: memref<1x8x256xf32, #tpu.memory_space<vmem>>) attributes {dimension_semantics = [#tpu.dimension_semantics<parallel>], iteration_bounds = array<i64: 2>, scalar_prefetch = 0 : i64, scratch_operands = 0 : i64, tpu.core_type = #tpu.core_type<tc>, window_params = [{pipeline_mode = #tpu.pipeline_mode<synchronous>, transform_indices = @transform_0, window_bounds = array<i64: 9, 1, 256>}, {transform_indices = @transform_1, window_bounds = array<i64: 1, 4, 256>}, {pipeline_mode = #tpu.pipeline_mode<synchronous>, transform_indices = @transform_2, window_bounds = array<i64: 3, 3, 8, 4>}, {pipeline_mode = #tpu.pipeline_mode<synchronous>, transform_indices = @transform_3, window_bounds = array<i64: 8, 1>}, {pipeline_mode = #tpu.pipeline_mode<synchronous>, transform_indices = @transform_4, window_bounds = array<i64: 8, 1>}, {pipeline_mode = #tpu.pipeline_mode<synchronous>, transform_indices = @transform_5, window_bounds = array<i64: 3, 3, 8, 8>}, {pipeline_mode = #tpu.pipeline_mode<synchronous>, transform_indices = @transform_6, window_bounds = array<i64: 8, 1>}, {pipeline_mode = #tpu.pipeline_mode<synchronous>, transform_indices = @transform_7, window_bounds = array<i64: 8, 1>}, {transform_indices = @transform_8, window_bounds = array<i64: 1, 8, 256>}]} {
    %c0 = arith.constant 0 : index
    %c0_0 = arith.constant 0 : index
    %c0_1 = arith.constant 0 : index
    %0 = vector.load %arg2[%c0, %c0_0, %c0_1] : memref<1x4x256xf32, #tpu.memory_space<vmem>>, vector<1x4x256xf32>
    %1 = vector.shape_cast %0 : vector<1x4x256xf32> to vector<4x256xf32>
    %cst = arith.constant 0.000000e+00 : f32
    %2 = vector.broadcast %cst : f32 to vector<8x256xf32>
    %c17_i32 = arith.constant 17 : i32
    %3 = tpu.dynamic_rotate %1 by %c17_i32 dim 1 : vector<4x256xf32>, i32 -> vector<4x256xf32>
    %c0_2 = arith.constant 0 : index
    %c0_3 = arith.constant 0 : index
    %c0_4 = arith.constant 0 : index
    %4 = vector.load %arg1[%c0_2, %c0_3, %c0_4] : memref<9x1x256xf32, #tpu.memory_space<vmem>>, vector<1x1x256xf32>
    %5 = vector.shape_cast %4 : vector<1x1x256xf32> to vector<1x256xf32>
    %6 = vector.broadcast %5 : vector<1x256xf32> to vector<4x256xf32>
    %7 = arith.mulf %3, %6 : vector<4x256xf32>
    %c0_5 = arith.constant 0 : index
    %c0_6 = arith.constant 0 : index
    %c0_7 = arith.constant 0 : index
    %c0_8 = arith.constant 0 : index
    %8 = vector.load %arg3[%c0_5, %c0_6, %c0_7, %c0_8] : memref<3x3x8x4xf32, #tpu.memory_space<vmem>>, vector<1x1x8x4xf32>
    %9 = vector.shape_cast %8 : vector<1x1x8x4xf32> to vector<8x4xf32>
    %cst_9 = arith.constant dense<0.000000e+00> : vector<8x256xf32>
    %10 = tpu.matmul %9, %7, %cst_9 {dimension_numbers = #tpu.dot_dimension_numbers<[1], [0], [0], [1], [0, 0, 1, 1], [], []>} : vector<8x4xf32>, vector<4x256xf32>, vector<8x256xf32> -> vector<8x256xf32>
    %11 = arith.addf %2, %10 : vector<8x256xf32>
    %c16_i32 = arith.constant 16 : i32
    %12 = tpu.dynamic_rotate %1 by %c16_i32 dim 1 : vector<4x256xf32>, i32 -> vector<4x256xf32>
    %c1 = arith.constant 1 : index
    %c0_10 = arith.constant 0 : index
    %c0_11 = arith.constant 0 : index
    %13 = vector.load %arg1[%c1, %c0_10, %c0_11] : memref<9x1x256xf32, #tpu.memory_space<vmem>>, vector<1x1x256xf32>
    %14 = vector.shape_cast %13 : vector<1x1x256xf32> to vector<1x256xf32>
    %15 = vector.broadcast %14 : vector<1x256xf32> to vector<4x256xf32>
    %16 = arith.mulf %12, %15 : vector<4x256xf32>
    %c0_12 = arith.constant 0 : index
    %c1_13 = arith.constant 1 : index
    %c0_14 = arith.constant 0 : index
    %c0_15 = arith.constant 0 : index
    %17 = vector.load %arg3[%c0_12, %c1_13, %c0_14, %c0_15] : memref<3x3x8x4xf32, #tpu.memory_space<vmem>>, vector<1x1x8x4xf32>
    %18 = vector.shape_cast %17 : vector<1x1x8x4xf32> to vector<8x4xf32>
    %cst_16 = arith.constant dense<0.000000e+00> : vector<8x256xf32>
    %19 = tpu.matmul %18, %16, %cst_16 {dimension_numbers = #tpu.dot_dimension_numbers<[1], [0], [0], [1], [0, 0, 1, 1], [], []>} : vector<8x4xf32>, vector<4x256xf32>, vector<8x256xf32> -> vector<8x256xf32>
    %20 = arith.addf %11, %19 : vector<8x256xf32>
    %c15_i32 = arith.constant 15 : i32
    %21 = tpu.dynamic_rotate %1 by %c15_i32 dim 1 : vector<4x256xf32>, i32 -> vector<4x256xf32>
    %c2 = arith.constant 2 : index
    %c0_17 = arith.constant 0 : index
    %c0_18 = arith.constant 0 : index
    %22 = vector.load %arg1[%c2, %c0_17, %c0_18] : memref<9x1x256xf32, #tpu.memory_space<vmem>>, vector<1x1x256xf32>
    %23 = vector.shape_cast %22 : vector<1x1x256xf32> to vector<1x256xf32>
    %24 = vector.broadcast %23 : vector<1x256xf32> to vector<4x256xf32>
    %25 = arith.mulf %21, %24 : vector<4x256xf32>
    %c0_19 = arith.constant 0 : index
    %c2_20 = arith.constant 2 : index
    %c0_21 = arith.constant 0 : index
    %c0_22 = arith.constant 0 : index
    %26 = vector.load %arg3[%c0_19, %c2_20, %c0_21, %c0_22] : memref<3x3x8x4xf32, #tpu.memory_space<vmem>>, vector<1x1x8x4xf32>
    %27 = vector.shape_cast %26 : vector<1x1x8x4xf32> to vector<8x4xf32>
    %cst_23 = arith.constant dense<0.000000e+00> : vector<8x256xf32>
    %28 = tpu.matmul %27, %25, %cst_23 {dimension_numbers = #tpu.dot_dimension_numbers<[1], [0], [0], [1], [0, 0, 1, 1], [], []>} : vector<8x4xf32>, vector<4x256xf32>, vector<8x256xf32> -> vector<8x256xf32>
    %29 = arith.addf %20, %28 : vector<8x256xf32>
    %c1_i32 = arith.constant 1 : i32
    %30 = tpu.dynamic_rotate %1 by %c1_i32 dim 1 : vector<4x256xf32>, i32 -> vector<4x256xf32>
    %c3 = arith.constant 3 : index
    %c0_24 = arith.constant 0 : index
    %c0_25 = arith.constant 0 : index
    %31 = vector.load %arg1[%c3, %c0_24, %c0_25] : memref<9x1x256xf32, #tpu.memory_space<vmem>>, vector<1x1x256xf32>
    %32 = vector.shape_cast %31 : vector<1x1x256xf32> to vector<1x256xf32>
    %33 = vector.broadcast %32 : vector<1x256xf32> to vector<4x256xf32>
    %34 = arith.mulf %30, %33 : vector<4x256xf32>
    %c1_26 = arith.constant 1 : index
    %c0_27 = arith.constant 0 : index
    %c0_28 = arith.constant 0 : index
    %c0_29 = arith.constant 0 : index
    %35 = vector.load %arg3[%c1_26, %c0_27, %c0_28, %c0_29] : memref<3x3x8x4xf32, #tpu.memory_space<vmem>>, vector<1x1x8x4xf32>
    %36 = vector.shape_cast %35 : vector<1x1x8x4xf32> to vector<8x4xf32>
    %cst_30 = arith.constant dense<0.000000e+00> : vector<8x256xf32>
    %37 = tpu.matmul %36, %34, %cst_30 {dimension_numbers = #tpu.dot_dimension_numbers<[1], [0], [0], [1], [0, 0, 1, 1], [], []>} : vector<8x4xf32>, vector<4x256xf32>, vector<8x256xf32> -> vector<8x256xf32>
    %38 = arith.addf %29, %37 : vector<8x256xf32>
    %c1_31 = arith.constant 1 : index
    %c1_32 = arith.constant 1 : index
    %c0_33 = arith.constant 0 : index
    %c0_34 = arith.constant 0 : index
    %39 = vector.load %arg3[%c1_31, %c1_32, %c0_33, %c0_34] : memref<3x3x8x4xf32, #tpu.memory_space<vmem>>, vector<1x1x8x4xf32>
    %40 = vector.shape_cast %39 : vector<1x1x8x4xf32> to vector<8x4xf32>
    %cst_35 = arith.constant dense<0.000000e+00> : vector<8x256xf32>
    %41 = tpu.matmul %40, %1, %cst_35 {dimension_numbers = #tpu.dot_dimension_numbers<[1], [0], [0], [1], [0, 0, 1, 1], [], []>} : vector<8x4xf32>, vector<4x256xf32>, vector<8x256xf32> -> vector<8x256xf32>
    %42 = arith.addf %38, %41 : vector<8x256xf32>
    %c255_i32 = arith.constant 255 : i32
    %43 = tpu.dynamic_rotate %1 by %c255_i32 dim 1 : vector<4x256xf32>, i32 -> vector<4x256xf32>
    %c5 = arith.constant 5 : index
    %c0_36 = arith.constant 0 : index
    %c0_37 = arith.constant 0 : index
    %44 = vector.load %arg1[%c5, %c0_36, %c0_37] : memref<9x1x256xf32, #tpu.memory_space<vmem>>, vector<1x1x256xf32>
    %45 = vector.shape_cast %44 : vector<1x1x256xf32> to vector<1x256xf32>
    %46 = vector.broadcast %45 : vector<1x256xf32> to vector<4x256xf32>
    %47 = arith.mulf %43, %46 : vector<4x256xf32>
    %c1_38 = arith.constant 1 : index
    %c2_39 = arith.constant 2 : index
    %c0_40 = arith.constant 0 : index
    %c0_41 = arith.constant 0 : index
    %48 = vector.load %arg3[%c1_38, %c2_39, %c0_40, %c0_41] : memref<3x3x8x4xf32, #tpu.memory_space<vmem>>, vector<1x1x8x4xf32>
    %49 = vector.shape_cast %48 : vector<1x1x8x4xf32> to vector<8x4xf32>
    %cst_42 = arith.constant dense<0.000000e+00> : vector<8x256xf32>
    %50 = tpu.matmul %49, %47, %cst_42 {dimension_numbers = #tpu.dot_dimension_numbers<[1], [0], [0], [1], [0, 0, 1, 1], [], []>} : vector<8x4xf32>, vector<4x256xf32>, vector<8x256xf32> -> vector<8x256xf32>
    %51 = arith.addf %42, %50 : vector<8x256xf32>
    %c241_i32 = arith.constant 241 : i32
    %52 = tpu.dynamic_rotate %1 by %c241_i32 dim 1 : vector<4x256xf32>, i32 -> vector<4x256xf32>
    %c6 = arith.constant 6 : index
    %c0_43 = arith.constant 0 : index
    %c0_44 = arith.constant 0 : index
    %53 = vector.load %arg1[%c6, %c0_43, %c0_44] : memref<9x1x256xf32, #tpu.memory_space<vmem>>, vector<1x1x256xf32>
    %54 = vector.shape_cast %53 : vector<1x1x256xf32> to vector<1x256xf32>
    %55 = vector.broadcast %54 : vector<1x256xf32> to vector<4x256xf32>
    %56 = arith.mulf %52, %55 : vector<4x256xf32>
    %c2_45 = arith.constant 2 : index
    %c0_46 = arith.constant 0 : index
    %c0_47 = arith.constant 0 : index
    %c0_48 = arith.constant 0 : index
    %57 = vector.load %arg3[%c2_45, %c0_46, %c0_47, %c0_48] : memref<3x3x8x4xf32, #tpu.memory_space<vmem>>, vector<1x1x8x4xf32>
    %58 = vector.shape_cast %57 : vector<1x1x8x4xf32> to vector<8x4xf32>
    %cst_49 = arith.constant dense<0.000000e+00> : vector<8x256xf32>
    %59 = tpu.matmul %58, %56, %cst_49 {dimension_numbers = #tpu.dot_dimension_numbers<[1], [0], [0], [1], [0, 0, 1, 1], [], []>} : vector<8x4xf32>, vector<4x256xf32>, vector<8x256xf32> -> vector<8x256xf32>
    %60 = arith.addf %51, %59 : vector<8x256xf32>
    %c240_i32 = arith.constant 240 : i32
    %61 = tpu.dynamic_rotate %1 by %c240_i32 dim 1 : vector<4x256xf32>, i32 -> vector<4x256xf32>
    %c7 = arith.constant 7 : index
    %c0_50 = arith.constant 0 : index
    %c0_51 = arith.constant 0 : index
    %62 = vector.load %arg1[%c7, %c0_50, %c0_51] : memref<9x1x256xf32, #tpu.memory_space<vmem>>, vector<1x1x256xf32>
    %63 = vector.shape_cast %62 : vector<1x1x256xf32> to vector<1x256xf32>
    %64 = vector.broadcast %63 : vector<1x256xf32> to vector<4x256xf32>
    %65 = arith.mulf %61, %64 : vector<4x256xf32>
    %c2_52 = arith.constant 2 : index
    %c1_53 = arith.constant 1 : index
    %c0_54 = arith.constant 0 : index
    %c0_55 = arith.constant 0 : index
    %66 = vector.load %arg3[%c2_52, %c1_53, %c0_54, %c0_55] : memref<3x3x8x4xf32, #tpu.memory_space<vmem>>, vector<1x1x8x4xf32>
    %67 = vector.shape_cast %66 : vector<1x1x8x4xf32> to vector<8x4xf32>
    %cst_56 = arith.constant dense<0.000000e+00> : vector<8x256xf32>
    %68 = tpu.matmul %67, %65, %cst_56 {dimension_numbers = #tpu.dot_dimension_numbers<[1], [0], [0], [1], [0, 0, 1, 1], [], []>} : vector<8x4xf32>, vector<4x256xf32>, vector<8x256xf32> -> vector<8x256xf32>
    %69 = arith.addf %60, %68 : vector<8x256xf32>
    %c239_i32 = arith.constant 239 : i32
    %70 = tpu.dynamic_rotate %1 by %c239_i32 dim 1 : vector<4x256xf32>, i32 -> vector<4x256xf32>
    %c8 = arith.constant 8 : index
    %c0_57 = arith.constant 0 : index
    %c0_58 = arith.constant 0 : index
    %71 = vector.load %arg1[%c8, %c0_57, %c0_58] : memref<9x1x256xf32, #tpu.memory_space<vmem>>, vector<1x1x256xf32>
    %72 = vector.shape_cast %71 : vector<1x1x256xf32> to vector<1x256xf32>
    %73 = vector.broadcast %72 : vector<1x256xf32> to vector<4x256xf32>
    %74 = arith.mulf %70, %73 : vector<4x256xf32>
    %c2_59 = arith.constant 2 : index
    %c2_60 = arith.constant 2 : index
    %c0_61 = arith.constant 0 : index
    %c0_62 = arith.constant 0 : index
    %75 = vector.load %arg3[%c2_59, %c2_60, %c0_61, %c0_62] : memref<3x3x8x4xf32, #tpu.memory_space<vmem>>, vector<1x1x8x4xf32>
    %76 = vector.shape_cast %75 : vector<1x1x8x4xf32> to vector<8x4xf32>
    %cst_63 = arith.constant dense<0.000000e+00> : vector<8x256xf32>
    %77 = tpu.matmul %76, %74, %cst_63 {dimension_numbers = #tpu.dot_dimension_numbers<[1], [0], [0], [1], [0, 0, 1, 1], [], []>} : vector<8x4xf32>, vector<4x256xf32>, vector<8x256xf32> -> vector<8x256xf32>
    %78 = arith.addf %69, %77 : vector<8x256xf32>
    %c0_64 = arith.constant 0 : index
    %c0_65 = arith.constant 0 : index
    %79 = vector.load %arg4[%c0_64, %c0_65] : memref<8x1xf32, #tpu.memory_space<vmem>>, vector<8x1xf32>
    %80 = vector.broadcast %79 : vector<8x1xf32> to vector<8x256xf32>
    %81 = arith.mulf %78, %80 : vector<8x256xf32>
    %c0_66 = arith.constant 0 : index
    %c0_67 = arith.constant 0 : index
    %82 = vector.load %arg5[%c0_66, %c0_67] : memref<8x1xf32, #tpu.memory_space<vmem>>, vector<8x1xf32>
    %83 = vector.broadcast %82 : vector<8x1xf32> to vector<8x256xf32>
    %84 = arith.addf %81, %83 : vector<8x256xf32>
    %cst_68 = arith.constant 0.000000e+00 : f32
    %85 = vector.broadcast %cst_68 : f32 to vector<8x256xf32>
    %86 = arith.maximumf %84, %85 : vector<8x256xf32>
    %cst_69 = arith.constant 0.000000e+00 : f32
    %87 = vector.broadcast %cst_69 : f32 to vector<8x256xf32>
    %c17_i32_70 = arith.constant 17 : i32
    %88 = tpu.dynamic_rotate %86 by %c17_i32_70 dim 1 : vector<8x256xf32>, i32 -> vector<8x256xf32>
    %c0_71 = arith.constant 0 : index
    %c0_72 = arith.constant 0 : index
    %c0_73 = arith.constant 0 : index
    %89 = vector.load %arg1[%c0_71, %c0_72, %c0_73] : memref<9x1x256xf32, #tpu.memory_space<vmem>>, vector<1x1x256xf32>
    %90 = vector.shape_cast %89 : vector<1x1x256xf32> to vector<1x256xf32>
    %91 = vector.broadcast %90 : vector<1x256xf32> to vector<8x256xf32>
    %92 = arith.mulf %88, %91 : vector<8x256xf32>
    %c0_74 = arith.constant 0 : index
    %c0_75 = arith.constant 0 : index
    %c0_76 = arith.constant 0 : index
    %c0_77 = arith.constant 0 : index
    %93 = vector.load %arg6[%c0_74, %c0_75, %c0_76, %c0_77] : memref<3x3x8x8xf32, #tpu.memory_space<vmem>>, vector<1x1x8x8xf32>
    %94 = vector.shape_cast %93 : vector<1x1x8x8xf32> to vector<8x8xf32>
    %cst_78 = arith.constant dense<0.000000e+00> : vector<8x256xf32>
    %95 = tpu.matmul %94, %92, %cst_78 {dimension_numbers = #tpu.dot_dimension_numbers<[1], [0], [0], [1], [0, 0, 1, 1], [], []>} : vector<8x8xf32>, vector<8x256xf32>, vector<8x256xf32> -> vector<8x256xf32>
    %96 = arith.addf %87, %95 : vector<8x256xf32>
    %c16_i32_79 = arith.constant 16 : i32
    %97 = tpu.dynamic_rotate %86 by %c16_i32_79 dim 1 : vector<8x256xf32>, i32 -> vector<8x256xf32>
    %c1_80 = arith.constant 1 : index
    %c0_81 = arith.constant 0 : index
    %c0_82 = arith.constant 0 : index
    %98 = vector.load %arg1[%c1_80, %c0_81, %c0_82] : memref<9x1x256xf32, #tpu.memory_space<vmem>>, vector<1x1x256xf32>
    %99 = vector.shape_cast %98 : vector<1x1x256xf32> to vector<1x256xf32>
    %100 = vector.broadcast %99 : vector<1x256xf32> to vector<8x256xf32>
    %101 = arith.mulf %97, %100 : vector<8x256xf32>
    %c0_83 = arith.constant 0 : index
    %c1_84 = arith.constant 1 : index
    %c0_85 = arith.constant 0 : index
    %c0_86 = arith.constant 0 : index
    %102 = vector.load %arg6[%c0_83, %c1_84, %c0_85, %c0_86] : memref<3x3x8x8xf32, #tpu.memory_space<vmem>>, vector<1x1x8x8xf32>
    %103 = vector.shape_cast %102 : vector<1x1x8x8xf32> to vector<8x8xf32>
    %cst_87 = arith.constant dense<0.000000e+00> : vector<8x256xf32>
    %104 = tpu.matmul %103, %101, %cst_87 {dimension_numbers = #tpu.dot_dimension_numbers<[1], [0], [0], [1], [0, 0, 1, 1], [], []>} : vector<8x8xf32>, vector<8x256xf32>, vector<8x256xf32> -> vector<8x256xf32>
    %105 = arith.addf %96, %104 : vector<8x256xf32>
    %c15_i32_88 = arith.constant 15 : i32
    %106 = tpu.dynamic_rotate %86 by %c15_i32_88 dim 1 : vector<8x256xf32>, i32 -> vector<8x256xf32>
    %c2_89 = arith.constant 2 : index
    %c0_90 = arith.constant 0 : index
    %c0_91 = arith.constant 0 : index
    %107 = vector.load %arg1[%c2_89, %c0_90, %c0_91] : memref<9x1x256xf32, #tpu.memory_space<vmem>>, vector<1x1x256xf32>
    %108 = vector.shape_cast %107 : vector<1x1x256xf32> to vector<1x256xf32>
    %109 = vector.broadcast %108 : vector<1x256xf32> to vector<8x256xf32>
    %110 = arith.mulf %106, %109 : vector<8x256xf32>
    %c0_92 = arith.constant 0 : index
    %c2_93 = arith.constant 2 : index
    %c0_94 = arith.constant 0 : index
    %c0_95 = arith.constant 0 : index
    %111 = vector.load %arg6[%c0_92, %c2_93, %c0_94, %c0_95] : memref<3x3x8x8xf32, #tpu.memory_space<vmem>>, vector<1x1x8x8xf32>
    %112 = vector.shape_cast %111 : vector<1x1x8x8xf32> to vector<8x8xf32>
    %cst_96 = arith.constant dense<0.000000e+00> : vector<8x256xf32>
    %113 = tpu.matmul %112, %110, %cst_96 {dimension_numbers = #tpu.dot_dimension_numbers<[1], [0], [0], [1], [0, 0, 1, 1], [], []>} : vector<8x8xf32>, vector<8x256xf32>, vector<8x256xf32> -> vector<8x256xf32>
    %114 = arith.addf %105, %113 : vector<8x256xf32>
    %c1_i32_97 = arith.constant 1 : i32
    %115 = tpu.dynamic_rotate %86 by %c1_i32_97 dim 1 : vector<8x256xf32>, i32 -> vector<8x256xf32>
    %c3_98 = arith.constant 3 : index
    %c0_99 = arith.constant 0 : index
    %c0_100 = arith.constant 0 : index
    %116 = vector.load %arg1[%c3_98, %c0_99, %c0_100] : memref<9x1x256xf32, #tpu.memory_space<vmem>>, vector<1x1x256xf32>
    %117 = vector.shape_cast %116 : vector<1x1x256xf32> to vector<1x256xf32>
    %118 = vector.broadcast %117 : vector<1x256xf32> to vector<8x256xf32>
    %119 = arith.mulf %115, %118 : vector<8x256xf32>
    %c1_101 = arith.constant 1 : index
    %c0_102 = arith.constant 0 : index
    %c0_103 = arith.constant 0 : index
    %c0_104 = arith.constant 0 : index
    %120 = vector.load %arg6[%c1_101, %c0_102, %c0_103, %c0_104] : memref<3x3x8x8xf32, #tpu.memory_space<vmem>>, vector<1x1x8x8xf32>
    %121 = vector.shape_cast %120 : vector<1x1x8x8xf32> to vector<8x8xf32>
    %cst_105 = arith.constant dense<0.000000e+00> : vector<8x256xf32>
    %122 = tpu.matmul %121, %119, %cst_105 {dimension_numbers = #tpu.dot_dimension_numbers<[1], [0], [0], [1], [0, 0, 1, 1], [], []>} : vector<8x8xf32>, vector<8x256xf32>, vector<8x256xf32> -> vector<8x256xf32>
    %123 = arith.addf %114, %122 : vector<8x256xf32>
    %c1_106 = arith.constant 1 : index
    %c1_107 = arith.constant 1 : index
    %c0_108 = arith.constant 0 : index
    %c0_109 = arith.constant 0 : index
    %124 = vector.load %arg6[%c1_106, %c1_107, %c0_108, %c0_109] : memref<3x3x8x8xf32, #tpu.memory_space<vmem>>, vector<1x1x8x8xf32>
    %125 = vector.shape_cast %124 : vector<1x1x8x8xf32> to vector<8x8xf32>
    %cst_110 = arith.constant dense<0.000000e+00> : vector<8x256xf32>
    %126 = tpu.matmul %125, %86, %cst_110 {dimension_numbers = #tpu.dot_dimension_numbers<[1], [0], [0], [1], [0, 0, 1, 1], [], []>} : vector<8x8xf32>, vector<8x256xf32>, vector<8x256xf32> -> vector<8x256xf32>
    %127 = arith.addf %123, %126 : vector<8x256xf32>
    %c255_i32_111 = arith.constant 255 : i32
    %128 = tpu.dynamic_rotate %86 by %c255_i32_111 dim 1 : vector<8x256xf32>, i32 -> vector<8x256xf32>
    %c5_112 = arith.constant 5 : index
    %c0_113 = arith.constant 0 : index
    %c0_114 = arith.constant 0 : index
    %129 = vector.load %arg1[%c5_112, %c0_113, %c0_114] : memref<9x1x256xf32, #tpu.memory_space<vmem>>, vector<1x1x256xf32>
    %130 = vector.shape_cast %129 : vector<1x1x256xf32> to vector<1x256xf32>
    %131 = vector.broadcast %130 : vector<1x256xf32> to vector<8x256xf32>
    %132 = arith.mulf %128, %131 : vector<8x256xf32>
    %c1_115 = arith.constant 1 : index
    %c2_116 = arith.constant 2 : index
    %c0_117 = arith.constant 0 : index
    %c0_118 = arith.constant 0 : index
    %133 = vector.load %arg6[%c1_115, %c2_116, %c0_117, %c0_118] : memref<3x3x8x8xf32, #tpu.memory_space<vmem>>, vector<1x1x8x8xf32>
    %134 = vector.shape_cast %133 : vector<1x1x8x8xf32> to vector<8x8xf32>
    %cst_119 = arith.constant dense<0.000000e+00> : vector<8x256xf32>
    %135 = tpu.matmul %134, %132, %cst_119 {dimension_numbers = #tpu.dot_dimension_numbers<[1], [0], [0], [1], [0, 0, 1, 1], [], []>} : vector<8x8xf32>, vector<8x256xf32>, vector<8x256xf32> -> vector<8x256xf32>
    %136 = arith.addf %127, %135 : vector<8x256xf32>
    %c241_i32_120 = arith.constant 241 : i32
    %137 = tpu.dynamic_rotate %86 by %c241_i32_120 dim 1 : vector<8x256xf32>, i32 -> vector<8x256xf32>
    %c6_121 = arith.constant 6 : index
    %c0_122 = arith.constant 0 : index
    %c0_123 = arith.constant 0 : index
    %138 = vector.load %arg1[%c6_121, %c0_122, %c0_123] : memref<9x1x256xf32, #tpu.memory_space<vmem>>, vector<1x1x256xf32>
    %139 = vector.shape_cast %138 : vector<1x1x256xf32> to vector<1x256xf32>
    %140 = vector.broadcast %139 : vector<1x256xf32> to vector<8x256xf32>
    %141 = arith.mulf %137, %140 : vector<8x256xf32>
    %c2_124 = arith.constant 2 : index
    %c0_125 = arith.constant 0 : index
    %c0_126 = arith.constant 0 : index
    %c0_127 = arith.constant 0 : index
    %142 = vector.load %arg6[%c2_124, %c0_125, %c0_126, %c0_127] : memref<3x3x8x8xf32, #tpu.memory_space<vmem>>, vector<1x1x8x8xf32>
    %143 = vector.shape_cast %142 : vector<1x1x8x8xf32> to vector<8x8xf32>
    %cst_128 = arith.constant dense<0.000000e+00> : vector<8x256xf32>
    %144 = tpu.matmul %143, %141, %cst_128 {dimension_numbers = #tpu.dot_dimension_numbers<[1], [0], [0], [1], [0, 0, 1, 1], [], []>} : vector<8x8xf32>, vector<8x256xf32>, vector<8x256xf32> -> vector<8x256xf32>
    %145 = arith.addf %136, %144 : vector<8x256xf32>
    %c240_i32_129 = arith.constant 240 : i32
    %146 = tpu.dynamic_rotate %86 by %c240_i32_129 dim 1 : vector<8x256xf32>, i32 -> vector<8x256xf32>
    %c7_130 = arith.constant 7 : index
    %c0_131 = arith.constant 0 : index
    %c0_132 = arith.constant 0 : index
    %147 = vector.load %arg1[%c7_130, %c0_131, %c0_132] : memref<9x1x256xf32, #tpu.memory_space<vmem>>, vector<1x1x256xf32>
    %148 = vector.shape_cast %147 : vector<1x1x256xf32> to vector<1x256xf32>
    %149 = vector.broadcast %148 : vector<1x256xf32> to vector<8x256xf32>
    %150 = arith.mulf %146, %149 : vector<8x256xf32>
    %c2_133 = arith.constant 2 : index
    %c1_134 = arith.constant 1 : index
    %c0_135 = arith.constant 0 : index
    %c0_136 = arith.constant 0 : index
    %151 = vector.load %arg6[%c2_133, %c1_134, %c0_135, %c0_136] : memref<3x3x8x8xf32, #tpu.memory_space<vmem>>, vector<1x1x8x8xf32>
    %152 = vector.shape_cast %151 : vector<1x1x8x8xf32> to vector<8x8xf32>
    %cst_137 = arith.constant dense<0.000000e+00> : vector<8x256xf32>
    %153 = tpu.matmul %152, %150, %cst_137 {dimension_numbers = #tpu.dot_dimension_numbers<[1], [0], [0], [1], [0, 0, 1, 1], [], []>} : vector<8x8xf32>, vector<8x256xf32>, vector<8x256xf32> -> vector<8x256xf32>
    %154 = arith.addf %145, %153 : vector<8x256xf32>
    %c239_i32_138 = arith.constant 239 : i32
    %155 = tpu.dynamic_rotate %86 by %c239_i32_138 dim 1 : vector<8x256xf32>, i32 -> vector<8x256xf32>
    %c8_139 = arith.constant 8 : index
    %c0_140 = arith.constant 0 : index
    %c0_141 = arith.constant 0 : index
    %156 = vector.load %arg1[%c8_139, %c0_140, %c0_141] : memref<9x1x256xf32, #tpu.memory_space<vmem>>, vector<1x1x256xf32>
    %157 = vector.shape_cast %156 : vector<1x1x256xf32> to vector<1x256xf32>
    %158 = vector.broadcast %157 : vector<1x256xf32> to vector<8x256xf32>
    %159 = arith.mulf %155, %158 : vector<8x256xf32>
    %c2_142 = arith.constant 2 : index
    %c2_143 = arith.constant 2 : index
    %c0_144 = arith.constant 0 : index
    %c0_145 = arith.constant 0 : index
    %160 = vector.load %arg6[%c2_142, %c2_143, %c0_144, %c0_145] : memref<3x3x8x8xf32, #tpu.memory_space<vmem>>, vector<1x1x8x8xf32>
    %161 = vector.shape_cast %160 : vector<1x1x8x8xf32> to vector<8x8xf32>
    %cst_146 = arith.constant dense<0.000000e+00> : vector<8x256xf32>
    %162 = tpu.matmul %161, %159, %cst_146 {dimension_numbers = #tpu.dot_dimension_numbers<[1], [0], [0], [1], [0, 0, 1, 1], [], []>} : vector<8x8xf32>, vector<8x256xf32>, vector<8x256xf32> -> vector<8x256xf32>
    %163 = arith.addf %154, %162 : vector<8x256xf32>
    %c0_147 = arith.constant 0 : index
    %c0_148 = arith.constant 0 : index
    %164 = vector.load %arg7[%c0_147, %c0_148] : memref<8x1xf32, #tpu.memory_space<vmem>>, vector<8x1xf32>
    %165 = vector.broadcast %164 : vector<8x1xf32> to vector<8x256xf32>
    %166 = arith.mulf %163, %165 : vector<8x256xf32>
    %c0_149 = arith.constant 0 : index
    %c0_150 = arith.constant 0 : index
    %167 = vector.load %arg8[%c0_149, %c0_150] : memref<8x1xf32, #tpu.memory_space<vmem>>, vector<8x1xf32>
    %168 = vector.broadcast %167 : vector<8x1xf32> to vector<8x256xf32>
    %169 = arith.addf %166, %168 : vector<8x256xf32>
    %cst_151 = arith.constant 0.000000e+00 : f32
    %170 = vector.broadcast %cst_151 : f32 to vector<8x256xf32>
    %171 = arith.maximumf %169, %170 : vector<8x256xf32>
    %c0_152 = arith.constant 0 : index
    %c0_153 = arith.constant 0 : index
    %c0_154 = arith.constant 0 : index
    %172 = vector.load %arg9[%c0_152, %c0_153, %c0_154] : memref<1x8x256xf32, #tpu.memory_space<vmem>>, vector<1x8x256xf32>
    %173 = vector.shape_cast %172 : vector<1x8x256xf32> to vector<8x256xf32>
    %174 = vector.shape_cast %171 : vector<8x256xf32> to vector<1x8x256xf32>
    tpu.vector_store %arg9[%c0_152, %c0_153, %c0_154], %174 {strides = array<i32>} : memref<1x8x256xf32, #tpu.memory_space<vmem>>, vector<1x8x256xf32>,
    return
  }
  func.func @transform_0(%arg0: i32) -> (i32, i32, i32) {
    %c0_i32 = arith.constant 0 : i32
    %c0_i32_0 = arith.constant 0 : i32
    %c0_i32_1 = arith.constant 0 : i32
    %c0_i32_2 = arith.constant 0 : i32
    return %c0_i32, %c0_i32_0, %c0_i32_1 : i32, i32, i32
  }
  func.func @transform_1(%arg0: i32) -> (i32, i32, i32) {
    %c0_i32 = arith.constant 0 : i32
    %c0_i32_0 = arith.constant 0 : i32
    %c0_i32_1 = arith.constant 0 : i32
    return %arg0, %c0_i32, %c0_i32_0 : i32, i32, i32
  }
  func.func @transform_2(%arg0: i32) -> (i32, i32, i32, i32) {
    %c0_i32 = arith.constant 0 : i32
    %c0_i32_0 = arith.constant 0 : i32
    %c0_i32_1 = arith.constant 0 : i32
    %c0_i32_2 = arith.constant 0 : i32
    %c0_i32_3 = arith.constant 0 : i32
    return %c0_i32, %c0_i32_0, %c0_i32_1, %c0_i32_2 : i32, i32, i32, i32
  }
  func.func @transform_3(%arg0: i32) -> (i32, i32) {
    %c0_i32 = arith.constant 0 : i32
    %c0_i32_0 = arith.constant 0 : i32
    %c0_i32_1 = arith.constant 0 : i32
    return %c0_i32, %c0_i32_0 : i32, i32
  }
  func.func @transform_4(%arg0: i32) -> (i32, i32) {
    %c0_i32 = arith.constant 0 : i32
    %c0_i32_0 = arith.constant 0 : i32
    %c0_i32_1 = arith.constant 0 : i32
    return %c0_i32, %c0_i32_0 : i32, i32
  }
  func.func @transform_5(%arg0: i32) -> (i32, i32, i32, i32) {
    %c0_i32 = arith.constant 0 : i32
    %c0_i32_0 = arith.constant 0 : i32
    %c0_i32_1 = arith.constant 0 : i32
    %c0_i32_2 = arith.constant 0 : i32
    %c0_i32_3 = arith.constant 0 : i32
    return %c0_i32, %c0_i32_0, %c0_i32_1, %c0_i32_2 : i32, i32, i32, i32
  }
  func.func @transform_6(%arg0: i32) -> (i32, i32) {
    %c0_i32 = arith.constant 0 : i32
    %c0_i32_0 = arith.constant 0 : i32
    %c0_i32_1 = arith.constant 0 : i32
    return %c0_i32, %c0_i32_0 : i32, i32
  }
  func.func @transform_7(%arg0: i32) -> (i32, i32) {
    %c0_i32 = arith.constant 0 : i32
    %c0_i32_0 = arith.constant 0 : i32
    %c0_i32_1 = arith.constant 0 : i32
    return %c0_i32, %c0_i32_0 : i32, i32
  }
  func.func @transform_8(%arg0: i32) -> (i32, i32, i32) {
    %c0_i32 = arith.constant 0 : i32
    %c0_i32_0 = arith.constant 0 : i32
    %c0_i32_1 = arith.constant 0 : i32
    return %arg0, %c0_i32, %c0_i32_0 : i32, i32, i32
  }
}

</mosaic_0001>

<llo_original>
// kernel: tpu_custom_call.1
$region0: #{tpu_custom_call.1}
  #allocation0 [shape = 'u32[]', space=smem, size = 0x4, offset = 0x4, fixed_abs, tag = 'smem constant byte address 0x4 - core index']
  #allocation1 [shape = 'u32[144,128]{1,0:T(1,128)}', space=vmem, size = 0x12000, scoped, tag = 'internal scratch']
  %s0 = inlined_call_operand.vmem [shape: f32[9,1,256], index: 0, kind: input, shape index: {}]
  %s1 = inlined_call_operand.vmem [shape: f32[2,4,256], index: 1, kind: input, shape index: {}]
  %s2 = inlined_call_operand.vmem [shape: f32[3,3,8,4], index: 2, kind: input, shape index: {}]
  %s3 = inlined_call_operand.vmem [shape: f32[8,1], index: 3, kind: input, shape index: {}]
  %s4 = inlined_call_operand.vmem [shape: f32[8,1], index: 4, kind: input, shape index: {}]
  %s5 = inlined_call_operand.vmem [shape: f32[3,3,8,8], index: 5, kind: input, shape index: {}]
  %s6 = inlined_call_operand.vmem [shape: f32[8,1], index: 6, kind: input, shape index: {}]
  %s7 = inlined_call_operand.vmem [shape: f32[8,1], index: 7, kind: input, shape index: {}]
  %s8 = inlined_call_operand.hbm [shape: f32[2,8,256], index: 8, kind: output, shape index: {}]
  %s9 = sld [smem:[#allocation0]]
  $region65: #{tpu_custom_call.1} parent=0
    _
  %s11 = ssub.s32 1, %s9
  %s12 = scalar_select 0, %s11, %s9
  $region1: #{tpu_custom_call.1} parent=0
    #allocation2 [shape = 'u8[16384]{0}', space=vmem, size = 0x4000, scoped, tag = 'output window, operand 0']
    #allocation3 [shape = 's32[2]{0}', space=sflag, size = 0x8, scoped, tag = 'scoped memory for tpu_custom_call.1']
    %13 = vsyncpa [#allocation3], 0
    %s14 = scalar_lea.sflag [#allocation3], 1
    %15 = vsyncpa %s14, 0
    loop: start=0, step=1, limit=4
    $region2: #{tpu_custom_call.1} parent=1 // loop_pre_header
      _
    $region3: #{tpu_custom_call.1} parent=1 // loop_header
      %s17 = sphi 0, %s21
      %p18 = scmp.ge.s32.totalorder %s17, 4
      %s25 = sphi 0, %s25
      %s27 = sphi 0, %s25
      %s28 = sphi 0, %s27
      %s42 = sphi 0, %s28
      %s48 = sphi 0, %s50
      %s51 = sphi 0, %s48
      %s52 = sphi 0, %s51
      %s68 = sphi 0, %s52
      %s72 = sphi 0, %s72
      %s74 = sphi 0, %s72
      %s75 = sphi 0, %s74
      %s89 = sphi 0, %s75
      %s93 = sphi 0, %s93
      %s95 = sphi 0, %s93
      %s96 = sphi 0, %s95
      %s110 = sphi 0, %s96
      %s114 = sphi 0, %s114
      %s116 = sphi 0, %s114
      %s117 = sphi 0, %s116
      %s131 = sphi 0, %s117
      %s135 = sphi 0, %s135
      %s137 = sphi 0, %s135
      %s138 = sphi 0, %s137
      %s152 = sphi 0, %s138
      %s156 = sphi 0, %s156
      %s158 = sphi 0, %s156
      %s159 = sphi 0, %s158
      %s173 = sphi 0, %s159
      %s177 = sphi 0, %s177
      %s179 = sphi 0, %s177
      %s180 = sphi 0, %s179
      %s194 = sphi 0, %s180
      %s200 = sphi 0, %s202
      %s203 = sphi 0, %s200
      %s204 = sphi 0, %s203
      %s220 = sphi 0, %s204
    $region4: #{tpu_custom_call.1} parent=1 // loop_header_branch
      %20 = sbr.rel (%p18) target = $region8
    $region5: #{tpu_custom_call.1} parent=1 // loop_body
      %s22 = ssub.s32 %s17, 1
      %s23 = ssub.s32 %s17, 2
      %s24 = sadd.s32 %s17, 1
      %s26 = sadd.s32 %s25, 1
      %p29 = scmp.eq.s32.totalorder %s17, 1
      %p30 = scmp.ne.s32.totalorder %s25, %s27
      %p31 = scmp.eq.s32.totalorder %s17, 0
      %p32 = por %p30, %p31
      %p33 = scmp.ne.s32.totalorder %s25, %s27
      %p34 = scmp.eq.s32.totalorder %s22, 1
      %p35 = por %p33, %p34
      %p36 = scmp.ne.s32.totalorder %s27, %s28
      %p37 = scmp.eq.s32.totalorder %s22, 0
      %p38 = por %p36, %p37
      %p39 = scmp.ne.s32.totalorder %s27, %s28
      %p40 = scmp.eq.s32.totalorder %s23, 1
      %p41 = por %p39, %p40
      %p43 = scmp.ne.s32.totalorder %s28, %s42
      %p44 = scmp.eq.s32.totalorder %s23, 0
      %p45 = por %p43, %p44
      %s46 = ssub.s32 %s17, %s24
      %p47 = scmp.eq.s32.totalorder %s46, 0
      %s49 = sadd.s32 %s48, 1
      %s50 = scalar_select %p47, %s48, %s49
      %p53 = pneg %p47
      %p54 = scmp.eq.s32.totalorder %s17, 1
      %p55 = por %p53, %p54
      %p56 = scmp.ne.s32.totalorder %s48, %s51
      %p57 = scmp.eq.s32.totalorder %s17, 0
      %p58 = por %p56, %p57
      %p59 = scmp.ne.s32.totalorder %s48, %s51
      %p60 = scmp.eq.s32.totalorder %s22, 1
      %p61 = por %p59, %p60
      %p62 = scmp.ne.s32.totalorder %s51, %s52
      %p63 = scmp.eq.s32.totalorder %s22, 0
      %p64 = por %p62, %p63
      %p65 = scmp.ne.s32.totalorder %s51, %s52
      %p66 = scmp.eq.s32.totalorder %s23, 1
      %p67 = por %p65, %p66
      %p69 = scmp.ne.s32.totalorder %s52, %s68
      %p70 = scmp.eq.s32.totalorder %s23, 0
      %p71 = por %p69, %p70
      %s73 = sadd.s32 %s72, 1
      %p76 = scmp.eq.s32.totalorder %s17, 1
      %p77 = scmp.ne.s32.totalorder %s72, %s74
      %p78 = scmp.eq.s32.totalorder %s17, 0
      %p79 = por %p77, %p78
      %p80 = scmp.ne.s32.totalorder %s72, %s74
      %p81 = scmp.eq.s32.totalorder %s22, 1
      %p82 = por %p80, %p81
      %p83 = scmp.ne.s32.totalorder %s74, %s75
      %p84 = scmp.eq.s32.totalorder %s22, 0
      %p85 = por %p83, %p84
      %p86 = scmp.ne.s32.totalorder %s74, %s75
      %p87 = scmp.eq.s32.totalorder %s23, 1
      %p88 = por %p86, %p87
      %p90 = scmp.ne.s32.totalorder %s75, %s89
      %p91 = scmp.eq.s32.totalorder %s23, 0
      %p92 = por %p90, %p91
      %s94 = sadd.s32 %s93, 1
      %p97 = scmp.eq.s32.totalorder %s17, 1
      %p98 = scmp.ne.s32.totalorder %s93, %s95
      %p99 = scmp.eq.s32.totalorder %s17, 0
      %p100 = por %p98, %p99
      %p101 = scmp.ne.s32.totalorder %s93, %s95
      %p102 = scmp.eq.s32.totalorder %s22, 1
      %p103 = por %p101, %p102
      %p104 = scmp.ne.s32.totalorder %s95, %s96
      %p105 = scmp.eq.s32.totalorder %s22, 0
      %p106 = por %p104, %p105
      %p107 = scmp.ne.s32.totalorder %s95, %s96
      %p108 = scmp.eq.s32.totalorder %s23, 1
      %p109 = por %p107, %p108
      %p111 = scmp.ne.s32.totalorder %s96, %s110
      %p112 = scmp.eq.s32.totalorder %s23, 0
      %p113 = por %p111, %p112
      %s115 = sadd.s32 %s114, 1
      %p118 = scmp.eq.s32.totalorder %s17, 1
      %p119 = scmp.ne.s32.totalorder %s114, %s116
      %p120 = scmp.eq.s32.totalorder %s17, 0
      %p121 = por %p119, %p120
      %p122 = scmp.ne.s32.totalorder %s114, %s116
      %p123 = scmp.eq.s32.totalorder %s22, 1
      %p124 = por %p122, %p123
      %p125 = scmp.ne.s32.totalorder %s116, %s117
      %p126 = scmp.eq.s32.totalorder %s22, 0
      %p127 = por %p125, %p126
      %p128 = scmp.ne.s32.totalorder %s116, %s117
      %p129 = scmp.eq.s32.totalorder %s23, 1
      %p130 = por %p128, %p129
      %p132 = scmp.ne.s32.totalorder %s117, %s131
      %p133 = scmp.eq.s32.totalorder %s23, 0
      %p134 = por %p132, %p133
      %s136 = sadd.s32 %s135, 1
      %p139 = scmp.eq.s32.totalorder %s17, 1
      %p140 = scmp.ne.s32.totalorder %s135, %s137
      %p141 = scmp.eq.s32.totalorder %s17, 0
      %p142 = por %p140, %p141
      %p143 = scmp.ne.s32.totalorder %s135, %s137
      %p144 = scmp.eq.s32.totalorder %s22, 1
      %p145 = por %p143, %p144
      %p146 = scmp.ne.s32.totalorder %s137, %s138
      %p147 = scmp.eq.s32.totalorder %s22, 0
      %p148 = por %p146, %p147
      %p149 = scmp.ne.s32.totalorder %s137, %s138
      %p150 = scmp.eq.s32.totalorder %s23, 1
      %p151 = por %p149, %p150
      %p153 = scmp.ne.s32.totalorder %s138, %s152
      %p154 = scmp.eq.s32.totalorder %s23, 0
      %p155 = por %p153, %p154
      %s157 = sadd.s32 %s156, 1
      %p160 = scmp.eq.s32.totalorder %s17, 1
      %p161 = scmp.ne.s32.totalorder %s156, %s158
      %p162 = scmp.eq.s32.totalorder %s17, 0
      %p163 = por %p161, %p162
      %p164 = scmp.ne.s32.totalorder %s156, %s158
      %p165 = scmp.eq.s32.totalorder %s22, 1
      %p166 = por %p164, %p165
      %p167 = scmp.ne.s32.totalorder %s158, %s159
      %p168 = scmp.eq.s32.totalorder %s22, 0
      %p169 = por %p167, %p168
      %p170 = scmp.ne.s32.totalorder %s158, %s159
      %p171 = scmp.eq.s32.totalorder %s23, 1
      %p172 = por %p170, %p171
      %p174 = scmp.ne.s32.totalorder %s159, %s173
      %p175 = scmp.eq.s32.totalorder %s23, 0
      %p176 = por %p174, %p175
      %s178 = sadd.s32 %s177, 1
      %p181 = scmp.eq.s32.totalorder %s17, 1
      %p182 = scmp.ne.s32.totalorder %s177, %s179
      %p183 = scmp.eq.s32.totalorder %s17, 0
      %p184 = por %p182, %p183
      %p185 = scmp.ne.s32.totalorder %s177, %s179
      %p186 = scmp.eq.s32.totalorder %s22, 1
      %p187 = por %p185, %p186
      %p188 = scmp.ne.s32.totalorder %s179, %s180
      %p189 = scmp.eq.s32.totalorder %s22, 0
      %p190 = por %p188, %p189
      %p191 = scmp.ne.s32.totalorder %s179, %s180
      %p192 = scmp.eq.s32.totalorder %s23, 1
      %p193 = por %p191, %p192
      %p195 = scmp.ne.s32.totalorder %s180, %s194
      %p196 = scmp.eq.s32.totalorder %s23, 0
      %p197 = por %p195, %p196
      %s198 = ssub.s32 %s17, %s24
      %p199 = scmp.eq.s32.totalorder %s198, 0
      %s201 = sadd.s32 %s200, 1
      %s202 = scalar_select %p199, %s200, %s201
      %p205 = pneg %p199
      %p206 = scmp.eq.s32.totalorder %s17, 1
      %p207 = por %p205, %p206
      %p208 = scmp.ne.s32.totalorder %s200, %s203
      %p209 = scmp.eq.s32.totalorder %s17, 0
      %p210 = por %p208, %p209
      %p211 = scmp.ne.s32.totalorder %s200, %s203
      %p212 = scmp.eq.s32.totalorder %s22, 1
      %p213 = por %p211, %p212
      %p214 = scmp.ne.s32.totalorder %s203, %s204
      %p215 = scmp.eq.s32.totalorder %s22, 0
      %p216 = por %p214, %p215
      %p217 = scmp.ne.s32.totalorder %s203, %s204
      %p218 = scmp.eq.s32.totalorder %s23, 1
      %p219 = por %p217, %p218
      %p221 = scmp.ne.s32.totalorder %s204, %s220
      %p222 = scmp.eq.s32.totalorder %s23, 0
      %p223 = por %p221, %p222
      %p224 = scmp.le.s32.totalorder 1, %s17
      %p225 = scmp.lt.s32.totalorder %s17, 3
      %p226 = pnand %p224, %p225
      %p227 = pneg %p226
      // Predicated region
      $region9: #{tpu_custom_call.1} parent=5 // pred_check
        _
      $region10: #{tpu_custom_call.1} parent=5 // pred_check_branch
        %229 = sbr.rel (%p226) target = $region12
      $region11: #{tpu_custom_call.1} parent=5 // pred_region
        %s230 = ssub.s32 %s17, 1
        // Predicated region
        $region13: #{tpu_custom_call.1} parent=11 // pred_check
          %p231 = pneg %p38
        $region14: #{tpu_custom_call.1} parent=11 // pred_check_branch
          %233 = sbr.rel (%p231) target = $region16
        $region15: #{tpu_custom_call.1} parent=11 // pred_region
          _
        $region16: #{tpu_custom_call.1} parent=11 // pred_fallthru
          _
        // Predicated region
        $region17: #{tpu_custom_call.1} parent=11 // pred_check
          %p234 = pneg %p85
        $region18: #{tpu_custom_call.1} parent=11 // pred_check_branch
          %236 = sbr.rel (%p234) target = $region20
        $region19: #{tpu_custom_call.1} parent=11 // pred_region
          _
        $region20: #{tpu_custom_call.1} parent=11 // pred_fallthru
          _
        // Predicated region
        $region21: #{tpu_custom_call.1} parent=11 // pred_check
          %p237 = pneg %p106
        $region22: #{tpu_custom_call.1} parent=11 // pred_check_branch
          %239 = sbr.rel (%p237) target = $region24
        $region23: #{tpu_custom_call.1} parent=11 // pred_region
          _
        $region24: #{tpu_custom_call.1} parent=11 // pred_fallthru
          _
        // Predicated region
        $region25: #{tpu_custom_call.1} parent=11 // pred_check
          %p240 = pneg %p127
        $region26: #{tpu_custom_call.1} parent=11 // pred_check_branch
          %242 = sbr.rel (%p240) target = $region28
        $region27: #{tpu_custom_call.1} parent=11 // pred_region
          _
        $region28: #{tpu_custom_call.1} parent=11 // pred_fallthru
          _
        // Predicated region
        $region29: #{tpu_custom_call.1} parent=11 // pred_check
          %p243 = pneg %p148
        $region30: #{tpu_custom_call.1} parent=11 // pred_check_branch
          %245 = sbr.rel (%p243) target = $region32
        $region31: #{tpu_custom_call.1} parent=11 // pred_region
          _
        $region32: #{tpu_custom_call.1} parent=11 // pred_fallthru
          _
        // Predicated region
        $region33: #{tpu_custom_call.1} parent=11 // pred_check
          %p246 = pneg %p169
        $region34: #{tpu_custom_call.1} parent=11 // pred_check_branch
          %248 = sbr.rel (%p246) target = $region36
        $region35: #{tpu_custom_call.1} parent=11 // pred_region
          _
        $region36: #{tpu_custom_call.1} parent=11 // pred_fallthru
          _
        // Predicated region
        $region37: #{tpu_custom_call.1} parent=11 // pred_check
          %p249 = pneg %p190
        $region38: #{tpu_custom_call.1} parent=11 // pred_check_branch
          %251 = sbr.rel (%p249) target = $region40
        $region39: #{tpu_custom_call.1} parent=11 // pred_region
          _
        $region40: #{tpu_custom_call.1} parent=11 // pred_fallthru
          _
      $region12: #{tpu_custom_call.1} parent=5 // pred_fallthru
        _
      %p252 = scmp.lt.s32.totalorder %s17, 2
      // Predicated region
      $region41: #{tpu_custom_call.1} parent=5 // pred_check
        %p253 = pneg %p252
      $region42: #{tpu_custom_call.1} parent=5 // pred_check_branch
        %255 = sbr.rel (%p253) target = $region44
      $region43: #{tpu_custom_call.1} parent=5 // pred_region
        // Predicated region
        $region45: #{tpu_custom_call.1} parent=43 // pred_check
          %p256 = pneg %p58
        $region46: #{tpu_custom_call.1} parent=43 // pred_check_branch
          %258 = sbr.rel (%p256) target = $region48
        $region47: #{tpu_custom_call.1} parent=43 // pred_region
          %p259 = scmp.lt.s32.totalorder %s17, 1
          %s260 = scalar_select %p259, %s17, 1
          %s261 = smul.addr %s260, 2
          %s262 = smul.addr %s261, 4
          %s263 = scalar_lea.vmem %s1, %s262
        $region48: #{tpu_custom_call.1} parent=43 // pred_fallthru
          _
      $region44: #{tpu_custom_call.1} parent=5 // pred_fallthru
        _
      %p264 = scmp.le.s32.totalorder 1, %s17
      %p265 = scmp.lt.s32.totalorder %s17, 3
      %p266 = pnand %p264, %p265
      %p267 = pneg %p266
      // Predicated region
      $region49: #{tpu_custom_call.1} parent=5 // pred_check
        _
      $region50: #{tpu_custom_call.1} parent=5 // pred_check_branch
        %269 = sbr.rel (%p266) target = $region52
      $region51: #{tpu_custom_call.1} parent=5 // pred_region
        %s270 = ssub.s32 %s17, 1
        %p271 = pneg %p38
        %p272 = pneg %p35
        %p273 = scmp.lt.s32.totalorder %s22, 1
        %s274 = scalar_select %p273, %s22, 1
        %s275 = smul.addr %s274, 2
        %s276 = smul.addr %s275, 4
        %s277 = scalar_lea.vmem %s1, %s276
        %p278 = pneg %p64
        %p279 = pneg %p61
        %p280 = pneg %p85
        %p281 = pneg %p82
        %p282 = pneg %p106
        %p283 = pneg %p103
        %p284 = pneg %p127
        %p285 = pneg %p124
        %p286 = pneg %p148
        %p287 = pneg %p145
        %p288 = pneg %p169
        %p289 = pneg %p166
        %p290 = pneg %p190
        %p291 = pneg %p187
        %p292 = pneg %p216
        %p293 = pneg %p213
        %s294 = sand.u32 %s203, 1
        %s295 = scalar_lea.sflag [#allocation3], %s294
        %s296 = sand.u32 %s203, 1
        %s297 = smul.addr %s296, 16
        %s298 = scalar_lea.vmem [#allocation2], %s297
        %p299 = scmp.lt.s32.totalorder %s22, 1
        %s300 = scalar_select %p299, %s22, 1
        %s301 = smul.addr %s300, 2
        %s302 = smul.addr %s301, 4
        %s303 = scalar_lea.vmem %s1, %s302
        %v304 = vld [vmem:[%s303] sm:$0xff]
        %v306 = vcombine.high %v304, %v304
        %308 = vrot.lane.b32.xlu0 %v304, 17
        %v309 = vpop.permute.xlu0 %308
        %310 = vrot.lane.b32.xlu0 %v306, 17
        %v311 = vpop.permute.xlu0 %310
        %v312 = vlaneseq
        %v313 = vand.u32 %v312, 127
        %vm314 = vcmp.lt.s32.totalorder %v313, 17
        %v315 = vsel %vm314, %v309, %v311
        %v316 = vsel %vm314, %v311, %v309
        %v317 = vld [vmem:[%s0] sm:$0x3]
        %v319 = vlaneseq
        %v320 = vshrl.u32 %v319, 7
        %v321 = vsub.s32 0, %v320
        %v322 = vrot.slane %v317, %v321
        %v323 = vlaneseq
        %v324 = vshrl.u32 %v323, 7
        %v325 = vsub.s32 1, %v324
        %v326 = vrot.slane %v317, %v325
        %v329 = vmul.f32 %v316, %v322
        %v330 = vmul.f32 %v315, %v326
        %v331 = vld [vmem:[%s2] sm:$0xff]
        %332 = vrot.lane.b32.xlu0 %v304, 16
        %v333 = vpop.permute.xlu0 %332
        %334 = vrot.lane.b32.xlu0 %v306, 16
        %v335 = vpop.permute.xlu0 %334
        %vm336 = vcmp.lt.s32.totalorder %v313, 16
        %v337 = vsel %vm336, %v333, %v335
        %v338 = vsel %vm336, %v335, %v333
        %s339 = scalar_lea.vmem %s0, 2
        %v340 = vld [vmem:[%s339] sm:$0x3]
        %v342 = vlaneseq
        %v343 = vshrl.u32 %v342, 7
        %v344 = vsub.s32 0, %v343
        %v345 = vrot.slane %v340, %v344
        %v346 = vlaneseq
        %v347 = vshrl.u32 %v346, 7
        %v348 = vsub.s32 1, %v347
        %v349 = vrot.slane %v340, %v348
        %v352 = vmul.f32 %v338, %v345
        %v353 = vmul.f32 %v337, %v349
        %s354 = scalar_lea.vmem %s2, 8
        %v355 = vld [vmem:[%s354] sm:$0xff]
        %vm356 = vcmask 31744
        %v358 = vsel %vm356, %v355, 0
        %vm360 = vcmask 1043456
        %v362 = vsel %vm360, %v352, 0
        %v365 = vsel %vm360, %v353, 0
        %367 = vmatprep.subr.mxu0 %v365
        %368 = vmatpush1.msra.mxu0 %v362
        %369 = vmatprep.subr.mxu0 0.0
        %370 = vmatpush1.msra.mxu0 0.0
        %371 = vmatprep.subr.mxu0 0.0
        %372 = vmatpush1.msra.mxu0 0.0
        %373 = vmatprep.subr.mxu0 0.0
        %374 = vmatpush1.msra.mxu0 0.0
        %375 = vmatprep.subr.mxu0 0.0
        %376 = vmatpush1.msra.mxu0 0.0
        %377 = vmatprep.subr.mxu0 0.0
        %378 = vmatpush1.msra.mxu0 0.0
        %379 = vmatprep.subr.mxu0 0.0
        %380 = vmatpush1.msra.mxu0 0.0
        %381 = vmatprep.subr.mxu0 0.0
        %382 = vmatpush1.msra.mxu0 0.0
        %383 = vmatprep.subr.mxu0 0.0
        %384 = vmatpush1.msra.mxu0 0.0
        %385 = vmatprep.subr.mxu0 0.0
        %386 = vmatpush1.msra.mxu0 0.0
        %387 = vmatprep.subr.mxu0 0.0
        %388 = vmatpush1.msra.mxu0 0.0
        %389 = vmatprep.subr.mxu0 0.0
        %390 = vmatpush1.msra.mxu0 0.0
        %391 = vmatprep.subr.mxu0 0.0
        %392 = vmatpush1.msra.mxu0 0.0
        %393 = vmatprep.subr.mxu0 0.0
        %394 = vmatpush1.msra.mxu0 0.0
        %395 = vmatprep.subr.mxu0 0.0
        %396 = vmatpush1.msra.mxu0 0.0
        %397 = vmatprep.subr.mxu0 0.0
        %398 = vmatpush1.msra.mxu0 0.0
        %399 = vmatprep.subr.mxu0 0.0
        %400 = vmatpush1.msra.mxu0 0.0
        %401 = vmatprep.subr.mxu0 0.0
        %402 = vmatpush1.msra.mxu0 0.0
        %403 = vmatprep.subr.mxu0 0.0
        %404 = vmatpush1.msra.mxu0 0.0
        %405 = vmatprep.subr.mxu0 0.0
        %406 = vmatpush1.msra.mxu0 0.0
        %407 = vmatprep.subr.mxu0 0.0
        %408 = vmatpush1.msra.mxu0 0.0
        %409 = vmatprep.subr.mxu0 0.0
        %410 = vmatpush1.msra.mxu0 0.0
        %411 = vmatprep.subr.mxu0 0.0
        %412 = vmatpush1.msra.mxu0 0.0
        %413 = vmatprep.subr.mxu0 0.0
        %414 = vmatpush1.msra.mxu0 0.0
        %415 = vmatprep.subr.mxu0 0.0
        %416 = vmatpush1.msra.mxu0 0.0
        %417 = vmatprep.subr.mxu0 0.0
        %418 = vmatpush1.msra.mxu0 0.0
        %419 = vmatprep.subr.mxu0 0.0
        %420 = vmatpush1.msra.mxu0 0.0
        %421 = vmatprep.subr.mxu0 0.0
        %422 = vmatpush1.msra.mxu0 0.0
        %423 = vmatprep.subr.mxu0 0.0
        %424 = vmatpush1.msra.mxu0 0.0
        %425 = vmatprep.subr.mxu0 0.0
        %426 = vmatpush1.msra.mxu0 0.0
        %427 = vmatprep.subr.mxu0 0.0
        %428 = vmatpush1.msra.mxu0 0.0
        %429 = vmatprep.subr.mxu0 0.0
        %430 = vmatpush1.msra.mxu0 0.0
        %431 = vmatprep.mubr.f32.mxu0 0.0
        %432 = vmatmul.mubr.f32.gmra.mrb[0].mxu0 %v358
        %v433 = vpop.f32.mrb[0].mxu0
        %v434 = vadd.f32 0.0, %v433
        %v435 = vpop.f32.mrb[0].mxu0
        %v436 = vadd.f32 0.0, %v435
        %437 = vdwg.mxu0
        %v439 = vsel %vm356, %v331, 0
        %v442 = vsel %vm360, %v329, 0
        %v445 = vsel %vm360, %v330, 0
        %447 = vmatprep.subr.mxu0 %v445
        %448 = vmatpush1.msra.mxu0 %v442
        %449 = vmatprep.subr.mxu0 0.0
        %450 = vmatpush1.msra.mxu0 0.0
        %451 = vmatprep.subr.mxu0 0.0
        %452 = vmatpush1.msra.mxu0 0.0
        %453 = vmatprep.subr.mxu0 0.0
        %454 = vmatpush1.msra.mxu0 0.0
        %455 = vmatprep.subr.mxu0 0.0
        %456 = vmatpush1.msra.mxu0 0.0
        %457 = vmatprep.subr.mxu0 0.0
        %458 = vmatpush1.msra.mxu0 0.0
        %459 = vmatprep.subr.mxu0 0.0
        %460 = vmatpush1.msra.mxu0 0.0
        %461 = vmatprep.subr.mxu0 0.0
        %462 = vmatpush1.msra.mxu0 0.0
        %463 = vmatprep.subr.mxu0 0.0
        %464 = vmatpush1.msra.mxu0 0.0
        %465 = vmatprep.subr.mxu0 0.0
        %466 = vmatpush1.msra.mxu0 0.0
        %467 = vmatprep.subr.mxu0 0.0
        %468 = vmatpush1.msra.mxu0 0.0
        %469 = vmatprep.subr.mxu0 0.0
        %470 = vmatpush1.msra.mxu0 0.0
        %471 = vmatprep.subr.mxu0 0.0
        %472 = vmatpush1.msra.mxu0 0.0
        %473 = vmatprep.subr.mxu0 0.0
        %474 = vmatpush1.msra.mxu0 0.0
        %475 = vmatprep.subr.mxu0 0.0
        %476 = vmatpush1.msra.mxu0 0.0
        %477 = vmatprep.subr.mxu0 0.0
        %478 = vmatpush1.msra.mxu0 0.0
        %479 = vmatprep.subr.mxu0 0.0
        %480 = vmatpush1.msra.mxu0 0.0
        %481 = vmatprep.subr.mxu0 0.0
        %482 = vmatpush1.msra.mxu0 0.0
        %483 = vmatprep.subr.mxu0 0.0
        %484 = vmatpush1.msra.mxu0 0.0
        %485 = vmatprep.subr.mxu0 0.0
        %486 = vmatpush1.msra.mxu0 0.0
        %487 = vmatprep.subr.mxu0 0.0
        %488 = vmatpush1.msra.mxu0 0.0
        %489 = vmatprep.subr.mxu0 0.0
        %490 = vmatpush1.msra.mxu0 0.0
        %491 = vmatprep.subr.mxu0 0.0
        %492 = vmatpush1.msra.mxu0 0.0
        %493 = vmatprep.subr.mxu0 0.0
        %494 = vmatpush1.msra.mxu0 0.0
        %495 = vmatprep.subr.mxu0 0.0
        %496 = vmatpush1.msra.mxu0 0.0
        %497 = vmatprep.subr.mxu0 0.0
        %498 = vmatpush1.msra.mxu0 0.0
        %499 = vmatprep.subr.mxu0 0.0
        %500 = vmatpush1.msra.mxu0 0.0
        %501 = vmatprep.subr.mxu0 0.0
        %502 = vmatpush1.msra.mxu0 0.0
        %503 = vmatprep.subr.mxu0 0.0
        %504 = vmatpush1.msra.mxu0 0.0
        %505 = vmatprep.subr.mxu0 0.0
        %506 = vmatpush1.msra.mxu0 0.0
        %507 = vmatprep.subr.mxu0 0.0
        %508 = vmatpush1.msra.mxu0 0.0
        %509 = vmatprep.subr.mxu0 0.0
        %510 = vmatpush1.msra.mxu0 0.0
        %511 = vmatprep.mubr.f32.mxu0 0.0
        %512 = vmatmul.mubr.f32.gmra.mrb[0].mxu0 %v439
        %v513 = vpop.f32.mrb[0].mxu0
        %v514 = vadd.f32 %v434, %v513
        %v515 = vpop.f32.mrb[0].mxu0
        %v516 = vadd.f32 %v436, %v515
        %517 = vdwg.mxu0
        %518 = vrot.lane.b32.xlu0 %v304, 15
        %v519 = vpop.permute.xlu0 %518
        %520 = vrot.lane.b32.xlu0 %v306, 15
        %v521 = vpop.permute.xlu0 %520
        %vm522 = vcmp.lt.s32.totalorder %v313, 15
        %v523 = vsel %vm522, %v519, %v521
        %v524 = vsel %vm522, %v521, %v519
        %s525 = scalar_lea.vmem %s0, 4
        %v526 = vld [vmem:[%s525] sm:$0x3]
        %v528 = vlaneseq
        %v529 = vshrl.u32 %v528, 7
        %v530 = vsub.s32 0, %v529
        %v531 = vrot.slane %v526, %v530
        %v532 = vlaneseq
        %v533 = vshrl.u32 %v532, 7
        %v534 = vsub.s32 1, %v533
        %v535 = vrot.slane %v526, %v534
        %v538 = vmul.f32 %v524, %v531
        %v539 = vmul.f32 %v523, %v535
        %s540 = scalar_lea.vmem %s2, 16
        %v541 = vld [vmem:[%s540] sm:$0xff]
        %v543 = vsel %vm356, %v541, 0
        %v546 = vsel %vm360, %v538, 0
        %v549 = vsel %vm360, %v539, 0
        %551 = vmatprep.subr.mxu0 %v549
        %552 = vmatpush1.msra.mxu0 %v546
        %553 = vmatprep.subr.mxu0 0.0
        %554 = vmatpush1.msra.mxu0 0.0
        %555 = vmatprep.subr.mxu0 0.0
        %556 = vmatpush1.msra.mxu0 0.0
        %557 = vmatprep.subr.mxu0 0.0
        %558 = vmatpush1.msra.mxu0 0.0
        %559 = vmatprep.subr.mxu0 0.0
        %560 = vmatpush1.msra.mxu0 0.0
        %561 = vmatprep.subr.mxu0 0.0
        %562 = vmatpush1.msra.mxu0 0.0
        %563 = vmatprep.subr.mxu0 0.0
        %564 = vmatpush1.msra.mxu0 0.0
        %565 = vmatprep.subr.mxu0 0.0
        %566 = vmatpush1.msra.mxu0 0.0
        %567 = vmatprep.subr.mxu0 0.0
        %568 = vmatpush1.msra.mxu0 0.0
        %569 = vmatprep.subr.mxu0 0.0
        %570 = vmatpush1.msra.mxu0 0.0
        %571 = vmatprep.subr.mxu0 0.0
        %572 = vmatpush1.msra.mxu0 0.0
        %573 = vmatprep.subr.mxu0 0.0
        %574 = vmatpush1.msra.mxu0 0.0
        %575 = vmatprep.subr.mxu0 0.0
        %576 = vmatpush1.msra.mxu0 0.0
        %577 = vmatprep.subr.mxu0 0.0
        %578 = vmatpush1.msra.mxu0 0.0
        %579 = vmatprep.subr.mxu0 0.0
        %580 = vmatpush1.msra.mxu0 0.0
        %581 = vmatprep.subr.mxu0 0.0
        %582 = vmatpush1.msra.mxu0 0.0
        %583 = vmatprep.subr.mxu0 0.0
        %584 = vmatpush1.msra.mxu0 0.0
        %585 = vmatprep.subr.mxu0 0.0
        %586 = vmatpush1.msra.mxu0 0.0
        %587 = vmatprep.subr.mxu0 0.0
        %588 = vmatpush1.msra.mxu0 0.0
        %589 = vmatprep.subr.mxu0 0.0
        %590 = vmatpush1.msra.mxu0 0.0
        %591 = vmatprep.subr.mxu0 0.0
        %592 = vmatpush1.msra.mxu0 0.0
        %593 = vmatprep.subr.mxu0 0.0
        %594 = vmatpush1.msra.mxu0 0.0
        %595 = vmatprep.subr.mxu0 0.0
        %596 = vmatpush1.msra.mxu0 0.0
        %597 = vmatprep.subr.mxu0 0.0
        %598 = vmatpush1.msra.mxu0 0.0
        %599 = vmatprep.subr.mxu0 0.0
        %600 = vmatpush1.msra.mxu0 0.0
        %601 = vmatprep.subr.mxu0 0.0
        %602 = vmatpush1.msra.mxu0 0.0
        %603 = vmatprep.subr.mxu0 0.0
        %604 = vmatpush1.msra.mxu0 0.0
        %605 = vmatprep.subr.mxu0 0.0
        %606 = vmatpush1.msra.mxu0 0.0
        %607 = vmatprep.subr.mxu0 0.0
        %608 = vmatpush1.msra.mxu0 0.0
        %609 = vmatprep.subr.mxu0 0.0
        %610 = vmatpush1.msra.mxu0 0.0
        %611 = vmatprep.subr.mxu0 0.0
        %612 = vmatpush1.msra.mxu0 0.0
        %613 = vmatprep.subr.mxu0 0.0
        %614 = vmatpush1.msra.mxu0 0.0
        %615 = vmatprep.mubr.f32.mxu0 0.0
        %616 = vmatmul.mubr.f32.gmra.mrb[0].mxu0 %v543
        %v617 = vpop.f32.mrb[0].mxu0
        %v618 = vadd.f32 0.0, %v617
        %v619 = vpop.f32.mrb[0].mxu0
        %v620 = vadd.f32 0.0, %v619
        %621 = vdwg.mxu0
        %v622 = vadd.f32 %v514, %v618
        %v623 = vadd.f32 %v516, %v620
        %624 = vrot.lane.b32.xlu0 %v304, 1
        %v625 = vpop.permute.xlu0 %624
        %626 = vrot.lane.b32.xlu0 %v306, 1
        %v627 = vpop.permute.xlu0 %626
        %vm628 = vcmp.lt.s32.totalorder %v313, 1
        %v629 = vsel %vm628, %v625, %v627
        %v630 = vsel %vm628, %v627, %v625
        %s631 = scalar_lea.vmem %s0, 6
        %v632 = vld [vmem:[%s631] sm:$0x3]
        %v634 = vlaneseq
        %v635 = vshrl.u32 %v634, 7
        %v636 = vsub.s32 0, %v635
        %v637 = vrot.slane %v632, %v636
        %v638 = vlaneseq
        %v639 = vshrl.u32 %v638, 7
        %v640 = vsub.s32 1, %v639
        %v641 = vrot.slane %v632, %v640
        %v644 = vmul.f32 %v630, %v637
        %v645 = vmul.f32 %v629, %v641
        %s646 = scalar_lea.vmem %s2, 24
        %v647 = vld [vmem:[%s646] sm:$0xff]
        %v649 = vsel %vm356, %v647, 0
        %v652 = vsel %vm360, %v644, 0
        %v655 = vsel %vm360, %v645, 0
        %657 = vmatprep.subr.mxu0 %v655
        %658 = vmatpush1.msra.mxu0 %v652
        %659 = vmatprep.subr.mxu0 0.0
        %660 = vmatpush1.msra.mxu0 0.0
        %661 = vmatprep.subr.mxu0 0.0
        %662 = vmatpush1.msra.mxu0 0.0
        %663 = vmatprep.subr.mxu0 0.0
        %664 = vmatpush1.msra.mxu0 0.0
        %665 = vmatprep.subr.mxu0 0.0
        %666 = vmatpush1.msra.mxu0 0.0
        %667 = vmatprep.subr.mxu0 0.0
        %668 = vmatpush1.msra.mxu0 0.0
        %669 = vmatprep.subr.mxu0 0.0
        %670 = vmatpush1.msra.mxu0 0.0
        %671 = vmatprep.subr.mxu0 0.0
        %672 = vmatpush1.msra.mxu0 0.0
        %673 = vmatprep.subr.mxu0 0.0
        %674 = vmatpush1.msra.mxu0 0.0
        %675 = vmatprep.subr.mxu0 0.0
        %676 = vmatpush1.msra.mxu0 0.0
        %677 = vmatprep.subr.mxu0 0.0
        %678 = vmatpush1.msra.mxu0 0.0
        %679 = vmatprep.subr.mxu0 0.0
        %680 = vmatpush1.msra.mxu0 0.0
        %681 = vmatprep.subr.mxu0 0.0
        %682 = vmatpush1.msra.mxu0 0.0
        %683 = vmatprep.subr.mxu0 0.0
        %684 = vmatpush1.msra.mxu0 0.0
        %685 = vmatprep.subr.mxu0 0.0
        %686 = vmatpush1.msra.mxu0 0.0
        %687 = vmatprep.subr.mxu0 0.0
        %688 = vmatpush1.msra.mxu0 0.0
        %689 = vmatprep.subr.mxu0 0.0
        %690 = vmatpush1.msra.mxu0 0.0
        %691 = vmatprep.subr.mxu0 0.0
        %692 = vmatpush1.msra.mxu0 0.0
        %693 = vmatprep.subr.mxu0 0.0
        %694 = vmatpush1.msra.mxu0 0.0
        %695 = vmatprep.subr.mxu0 0.0
        %696 = vmatpush1.msra.mxu0 0.0
        %697 = vmatprep.subr.mxu0 0.0
        %698 = vmatpush1.msra.mxu0 0.0
        %699 = vmatprep.subr.mxu0 0.0
        %700 = vmatpush1.msra.mxu0 0.0
        %701 = vmatprep.subr.mxu0 0.0
        %702 = vmatpush1.msra.mxu0 0.0
        %703 = vmatprep.subr.mxu0 0.0
        %704 = vmatpush1.msra.mxu0 0.0
        %705 = vmatprep.subr.mxu0 0.0
        %706 = vmatpush1.msra.mxu0 0.0
        %707 = vmatprep.subr.mxu0 0.0
        %708 = vmatpush1.msra.mxu0 0.0
        %709 = vmatprep.subr.mxu0 0.0
        %710 = vmatpush1.msra.mxu0 0.0
        %711 = vmatprep.subr.mxu0 0.0
        %712 = vmatpush1.msra.mxu0 0.0
        %713 = vmatprep.subr.mxu0 0.0
        %714 = vmatpush1.msra.mxu0 0.0
        %715 = vmatprep.subr.mxu0 0.0
        %716 = vmatpush1.msra.mxu0 0.0
        %717 = vmatprep.subr.mxu0 0.0
        %718 = vmatpush1.msra.mxu0 0.0
        %719 = vmatprep.subr.mxu0 0.0
        %720 = vmatpush1.msra.mxu0 0.0
        %721 = vmatprep.mubr.f32.mxu0 0.0
        %722 = vmatmul.mubr.f32.gmra.mrb[0].mxu0 %v649
        %v723 = vpop.f32.mrb[0].mxu0
        %v724 = vadd.f32 0.0, %v723
        %v725 = vpop.f32.mrb[0].mxu0
        %v726 = vadd.f32 0.0, %v725
        %727 = vdwg.mxu0
        %v728 = vadd.f32 %v622, %v724
        %v729 = vadd.f32 %v623, %v726
        %s730 = scalar_lea.vmem %s2, 32
        %v731 = vld [vmem:[%s730] sm:$0xff]
        %v733 = vsel %vm356, %v731, 0
        %v735 = vsel %vm360, %v304, 0
        %v737 = vsel %vm360, %v306, 0
        %739 = vmatprep.subr.mxu0 %v737
        %740 = vmatpush1.msra.mxu0 %v735
        %741 = vmatprep.subr.mxu0 0.0
        %742 = vmatpush1.msra.mxu0 0.0
        %743 = vmatprep.subr.mxu0 0.0
        %744 = vmatpush1.msra.mxu0 0.0
        %745 = vmatprep.subr.mxu0 0.0
        %746 = vmatpush1.msra.mxu0 0.0
        %747 = vmatprep.subr.mxu0 0.0
        %748 = vmatpush1.msra.mxu0 0.0
        %749 = vmatprep.subr.mxu0 0.0
        %750 = vmatpush1.msra.mxu0 0.0
        %751 = vmatprep.subr.mxu0 0.0
        %752 = vmatpush1.msra.mxu0 0.0
        %753 = vmatprep.subr.mxu0 0.0
        %754 = vmatpush1.msra.mxu0 0.0
        %755 = vmatprep.subr.mxu0 0.0
        %756 = vmatpush1.msra.mxu0 0.0
        %757 = vmatprep.subr.mxu0 0.0
        %758 = vmatpush1.msra.mxu0 0.0
        %759 = vmatprep.subr.mxu0 0.0
        %760 = vmatpush1.msra.mxu0 0.0
        %761 = vmatprep.subr.mxu0 0.0
        %762 = vmatpush1.msra.mxu0 0.0
        %763 = vmatprep.subr.mxu0 0.0
        %764 = vmatpush1.msra.mxu0 0.0
        %765 = vmatprep.subr.mxu0 0.0
        %766 = vmatpush1.msra.mxu0 0.0
        %767 = vmatprep.subr.mxu0 0.0
        %768 = vmatpush1.msra.mxu0 0.0
        %769 = vmatprep.subr.mxu0 0.0
        %770 = vmatpush1.msra.mxu0 0.0
        %771 = vmatprep.subr.mxu0 0.0
        %772 = vmatpush1.msra.mxu0 0.0
        %773 = vmatprep.subr.mxu0 0.0
        %774 = vmatpush1.msra.mxu0 0.0
        %775 = vmatprep.subr.mxu0 0.0
        %776 = vmatpush1.msra.mxu0 0.0
        %777 = vmatprep.subr.mxu0 0.0
        %778 = vmatpush1.msra.mxu0 0.0
        %779 = vmatprep.subr.mxu0 0.0
        %780 = vmatpush1.msra.mxu0 0.0
        %781 = vmatprep.subr.mxu0 0.0
        %782 = vmatpush1.msra.mxu0 0.0
        %783 = vmatprep.subr.mxu0 0.0
        %784 = vmatpush1.msra.mxu0 0.0
        %785 = vmatprep.subr.mxu0 0.0
        %786 = vmatpush1.msra.mxu0 0.0
        %787 = vmatprep.subr.mxu0 0.0
        %788 = vmatpush1.msra.mxu0 0.0
        %789 = vmatprep.subr.mxu0 0.0
        %790 = vmatpush1.msra.mxu0 0.0
        %791 = vmatprep.subr.mxu0 0.0
        %792 = vmatpush1.msra.mxu0 0.0
        %793 = vmatprep.subr.mxu0 0.0
        %794 = vmatpush1.msra.mxu0 0.0
        %795 = vmatprep.subr.mxu0 0.0
        %796 = vmatpush1.msra.mxu0 0.0
        %797 = vmatprep.subr.mxu0 0.0
        %798 = vmatpush1.msra.mxu0 0.0
        %799 = vmatprep.subr.mxu0 0.0
        %800 = vmatpush1.msra.mxu0 0.0
        %801 = vmatprep.subr.mxu0 0.0
        %802 = vmatpush1.msra.mxu0 0.0
        %803 = vmatprep.mubr.f32.mxu0 0.0
        %804 = vmatmul.mubr.f32.gmra.mrb[0].mxu0 %v733
        %v805 = vpop.f32.mrb[0].mxu0
        %v806 = vadd.f32 0.0, %v805
        %v807 = vpop.f32.mrb[0].mxu0
        %v808 = vadd.f32 0.0, %v807
        %809 = vdwg.mxu0
        %v810 = vadd.f32 %v728, %v806
        %v811 = vadd.f32 %v729, %v808
        %812 = vrot.lane.b32.xlu0 %v304, 127
        %v813 = vpop.permute.xlu0 %812
        %814 = vrot.lane.b32.xlu0 %v306, 127
        %v815 = vpop.permute.xlu0 %814
        %vm816 = vcmp.lt.s32.totalorder %v313, 127
        %v817 = vsel %vm816, %v813, %v815
        %v818 = vsel %vm816, %v815, %v813
        %s819 = scalar_lea.vmem %s0, 10
        %v820 = vld [vmem:[%s819] sm:$0x3]
        %v822 = vlaneseq
        %v823 = vshrl.u32 %v822, 7
        %v824 = vsub.s32 0, %v823
        %v825 = vrot.slane %v820, %v824
        %v826 = vlaneseq
        %v827 = vshrl.u32 %v826, 7
        %v828 = vsub.s32 1, %v827
        %v829 = vrot.slane %v820, %v828
        %v832 = vmul.f32 %v817, %v825
        %v833 = vmul.f32 %v818, %v829
        %s834 = scalar_lea.vmem %s2, 40
        %v835 = vld [vmem:[%s834] sm:$0xff]
        %v837 = vsel %vm356, %v835, 0
        %v840 = vsel %vm360, %v832, 0
        %v843 = vsel %vm360, %v833, 0
        %845 = vmatprep.subr.mxu0 %v843
        %846 = vmatpush1.msra.mxu0 %v840
        %847 = vmatprep.subr.mxu0 0.0
        %848 = vmatpush1.msra.mxu0 0.0
        %849 = vmatprep.subr.mxu0 0.0
        %850 = vmatpush1.msra.mxu0 0.0
        %851 = vmatprep.subr.mxu0 0.0
        %852 = vmatpush1.msra.mxu0 0.0
        %853 = vmatprep.subr.mxu0 0.0
        %854 = vmatpush1.msra.mxu0 0.0
        %855 = vmatprep.subr.mxu0 0.0
        %856 = vmatpush1.msra.mxu0 0.0
        %857 = vmatprep.subr.mxu0 0.0
        %858 = vmatpush1.msra.mxu0 0.0
        %859 = vmatprep.subr.mxu0 0.0
        %860 = vmatpush1.msra.mxu0 0.0
        %861 = vmatprep.subr.mxu0 0.0
        %862 = vmatpush1.msra.mxu0 0.0
        %863 = vmatprep.subr.mxu0 0.0
        %864 = vmatpush1.msra.mxu0 0.0
        %865 = vmatprep.subr.mxu0 0.0
        %866 = vmatpush1.msra.mxu0 0.0
        %867 = vmatprep.subr.mxu0 0.0
        %868 = vmatpush1.msra.mxu0 0.0
        %869 = vmatprep.subr.mxu0 0.0
        %870 = vmatpush1.msra.mxu0 0.0
        %871 = vmatprep.subr.mxu0 0.0
        %872 = vmatpush1.msra.mxu0 0.0
        %873 = vmatprep.subr.mxu0 0.0
        %874 = vmatpush1.msra.mxu0 0.0
        %875 = vmatprep.subr.mxu0 0.0
        %876 = vmatpush1.msra.mxu0 0.0
        %877 = vmatprep.subr.mxu0 0.0
        %878 = vmatpush1.msra.mxu0 0.0
        %879 = vmatprep.subr.mxu0 0.0
        %880 = vmatpush1.msra.mxu0 0.0
        %881 = vmatprep.subr.mxu0 0.0
        %882 = vmatpush1.msra.mxu0 0.0
        %883 = vmatprep.subr.mxu0 0.0
        %884 = vmatpush1.msra.mxu0 0.0
        %885 = vmatprep.subr.mxu0 0.0
        %886 = vmatpush1.msra.mxu0 0.0
        %887 = vmatprep.subr.mxu0 0.0
        %888 = vmatpush1.msra.mxu0 0.0
        %889 = vmatprep.subr.mxu0 0.0
        %890 = vmatpush1.msra.mxu0 0.0
        %891 = vmatprep.subr.mxu0 0.0
        %892 = vmatpush1.msra.mxu0 0.0
        %893 = vmatprep.subr.mxu0 0.0
        %894 = vmatpush1.msra.mxu0 0.0
        %895 = vmatprep.subr.mxu0 0.0
        %896 = vmatpush1.msra.mxu0 0.0
        %897 = vmatprep.subr.mxu0 0.0
        %898 = vmatpush1.msra.mxu0 0.0
        %899 = vmatprep.subr.mxu0 0.0
        %900 = vmatpush1.msra.mxu0 0.0
        %901 = vmatprep.subr.mxu0 0.0
        %902 = vmatpush1.msra.mxu0 0.0
        %903 = vmatprep.subr.mxu0 0.0
        %904 = vmatpush1.msra.mxu0 0.0
        %905 = vmatprep.subr.mxu0 0.0
        %906 = vmatpush1.msra.mxu0 0.0
        %907 = vmatprep.subr.mxu0 0.0
        %908 = vmatpush1.msra.mxu0 0.0
        %909 = vmatprep.mubr.f32.mxu0 0.0
        %910 = vmatmul.mubr.f32.gmra.mrb[0].mxu0 %v837
        %v911 = vpop.f32.mrb[0].mxu0
        %v912 = vadd.f32 0.0, %v911
        %v913 = vpop.f32.mrb[0].mxu0
        %v914 = vadd.f32 0.0, %v913
        %915 = vdwg.mxu0
        %v916 = vadd.f32 %v810, %v912
        %v917 = vadd.f32 %v811, %v914
        %918 = vrot.lane.b32.xlu0 %v304, 113
        %v919 = vpop.permute.xlu0 %918
        %920 = vrot.lane.b32.xlu0 %v306, 113
        %v921 = vpop.permute.xlu0 %920
        %vm922 = vcmp.lt.s32.totalorder %v313, 113
        %v923 = vsel %vm922, %v919, %v921
        %v924 = vsel %vm922, %v921, %v919
        %s925 = scalar_lea.vmem %s0, 12
        %v926 = vld [vmem:[%s925] sm:$0x3]
        %v928 = vlaneseq
        %v929 = vshrl.u32 %v928, 7
        %v930 = vsub.s32 0, %v929
        %v931 = vrot.slane %v926, %v930
        %v932 = vlaneseq
        %v933 = vshrl.u32 %v932, 7
        %v934 = vsub.s32 1, %v933
        %v935 = vrot.slane %v926, %v934
        %v938 = vmul.f32 %v923, %v931
        %v939 = vmul.f32 %v924, %v935
        %s940 = scalar_lea.vmem %s2, 48
        %v941 = vld [vmem:[%s940] sm:$0xff]
        %v943 = vsel %vm356, %v941, 0
        %v946 = vsel %vm360, %v938, 0
        %v949 = vsel %vm360, %v939, 0
        %951 = vmatprep.subr.mxu0 %v949
        %952 = vmatpush1.msra.mxu0 %v946
        %953 = vmatprep.subr.mxu0 0.0
        %954 = vmatpush1.msra.mxu0 0.0
        %955 = vmatprep.subr.mxu0 0.0
        %956 = vmatpush1.msra.mxu0 0.0
        %957 = vmatprep.subr.mxu0 0.0
        %958 = vmatpush1.msra.mxu0 0.0
        %959 = vmatprep.subr.mxu0 0.0
        %960 = vmatpush1.msra.mxu0 0.0
        %961 = vmatprep.subr.mxu0 0.0
        %962 = vmatpush1.msra.mxu0 0.0
        %963 = vmatprep.subr.mxu0 0.0
        %964 = vmatpush1.msra.mxu0 0.0
        %965 = vmatprep.subr.mxu0 0.0
        %966 = vmatpush1.msra.mxu0 0.0
        %967 = vmatprep.subr.mxu0 0.0
        %968 = vmatpush1.msra.mxu0 0.0
        %969 = vmatprep.subr.mxu0 0.0
        %970 = vmatpush1.msra.mxu0 0.0
        %971 = vmatprep.subr.mxu0 0.0
        %972 = vmatpush1.msra.mxu0 0.0
        %973 = vmatprep.subr.mxu0 0.0
        %974 = vmatpush1.msra.mxu0 0.0
        %975 = vmatprep.subr.mxu0 0.0
        %976 = vmatpush1.msra.mxu0 0.0
        %977 = vmatprep.subr.mxu0 0.0
        %978 = vmatpush1.msra.mxu0 0.0
        %979 = vmatprep.subr.mxu0 0.0
        %980 = vmatpush1.msra.mxu0 0.0
        %981 = vmatprep.subr.mxu0 0.0
        %982 = vmatpush1.msra.mxu0 0.0
        %983 = vmatprep.subr.mxu0 0.0
        %984 = vmatpush1.msra.mxu0 0.0
        %985 = vmatprep.subr.mxu0 0.0
        %986 = vmatpush1.msra.mxu0 0.0
        %987 = vmatprep.subr.mxu0 0.0
        %988 = vmatpush1.msra.mxu0 0.0
        %989 = vmatprep.subr.mxu0 0.0
        %990 = vmatpush1.msra.mxu0 0.0
        %991 = vmatprep.subr.mxu0 0.0
        %992 = vmatpush1.msra.mxu0 0.0
        %993 = vmatprep.subr.mxu0 0.0
        %994 = vmatpush1.msra.mxu0 0.0
        %995 = vmatprep.subr.mxu0 0.0
        %996 = vmatpush1.msra.mxu0 0.0
        %997 = vmatprep.subr.mxu0 0.0
        %998 = vmatpush1.msra.mxu0 0.0
        %999 = vmatprep.subr.mxu0 0.0
        %1000 = vmatpush1.msra.mxu0 0.0
        %1001 = vmatprep.subr.mxu0 0.0
        %1002 = vmatpush1.msra.mxu0 0.0
        %1003 = vmatprep.subr.mxu0 0.0
        %1004 = vmatpush1.msra.mxu0 0.0
        %1005 = vmatprep.subr.mxu0 0.0
        %1006 = vmatpush1.msra.mxu0 0.0
        %1007 = vmatprep.subr.mxu0 0.0
        %1008 = vmatpush1.msra.mxu0 0.0
        %1009 = vmatprep.subr.mxu0 0.0
        %1010 = vmatpush1.msra.mxu0 0.0
        %1011 = vmatprep.subr.mxu0 0.0
        %1012 = vmatpush1.msra.mxu0 0.0
        %1013 = vmatprep.subr.mxu0 0.0
        %1014 = vmatpush1.msra.mxu0 0.0
        %1015 = vmatprep.mubr.f32.mxu0 0.0
        %1016 = vmatmul.mubr.f32.gmra.mrb[0].mxu0 %v943
        %v1017 = vpop.f32.mrb[0].mxu0
        %v1018 = vadd.f32 0.0, %v1017
        %v1019 = vpop.f32.mrb[0].mxu0
        %v1020 = vadd.f32 0.0, %v1019
        %1021 = vdwg.mxu0
        %v1022 = vadd.f32 %v916, %v1018
        %v1023 = vadd.f32 %v917, %v1020
        %1024 = vrot.lane.b32.xlu0 %v304, 112
        %v1025 = vpop.permute.xlu0 %1024
        %1026 = vrot.lane.b32.xlu0 %v306, 112
        %v1027 = vpop.permute.xlu0 %1026
        %vm1028 = vcmp.lt.s32.totalorder %v313, 112
        %v1029 = vsel %vm1028, %v1025, %v1027
        %v1030 = vsel %vm1028, %v1027, %v1025
        %s1031 = scalar_lea.vmem %s0, 14
        %v1032 = vld [vmem:[%s1031] sm:$0x3]
        %v1034 = vlaneseq
        %v1035 = vshrl.u32 %v1034, 7
        %v1036 = vsub.s32 0, %v1035
        %v1037 = vrot.slane %v1032, %v1036
        %v1038 = vlaneseq
        %v1039 = vshrl.u32 %v1038, 7
        %v1040 = vsub.s32 1, %v1039
        %v1041 = vrot.slane %v1032, %v1040
        %v1044 = vmul.f32 %v1029, %v1037
        %v1045 = vmul.f32 %v1030, %v1041
        %s1046 = scalar_lea.vmem %s2, 56
        %v1047 = vld [vmem:[%s1046] sm:$0xff]
        %v1049 = vsel %vm356, %v1047, 0
        %v1052 = vsel %vm360, %v1044, 0
        %v1055 = vsel %vm360, %v1045, 0
        %1057 = vmatprep.subr.mxu0 %v1055
        %1058 = vmatpush1.msra.mxu0 %v1052
        %1059 = vmatprep.subr.mxu0 0.0
        %1060 = vmatpush1.msra.mxu0 0.0
        %1061 = vmatprep.subr.mxu0 0.0
        %1062 = vmatpush1.msra.mxu0 0.0
        %1063 = vmatprep.subr.mxu0 0.0
        %1064 = vmatpush1.msra.mxu0 0.0
        %1065 = vmatprep.subr.mxu0 0.0
        %1066 = vmatpush1.msra.mxu0 0.0
        %1067 = vmatprep.subr.mxu0 0.0
        %1068 = vmatpush1.msra.mxu0 0.0
        %1069 = vmatprep.subr.mxu0 0.0
        %1070 = vmatpush1.msra.mxu0 0.0
        %1071 = vmatprep.subr.mxu0 0.0
        %1072 = vmatpush1.msra.mxu0 0.0
        %1073 = vmatprep.subr.mxu0 0.0
        %1074 = vmatpush1.msra.mxu0 0.0
        %1075 = vmatprep.subr.mxu0 0.0
        %1076 = vmatpush1.msra.mxu0 0.0
        %1077 = vmatprep.subr.mxu0 0.0
        %1078 = vmatpush1.msra.mxu0 0.0
        %1079 = vmatprep.subr.mxu0 0.0
        %1080 = vmatpush1.msra.mxu0 0.0
        %1081 = vmatprep.subr.mxu0 0.0
        %1082 = vmatpush1.msra.mxu0 0.0
        %1083 = vmatprep.subr.mxu0 0.0
        %1084 = vmatpush1.msra.mxu0 0.0
        %1085 = vmatprep.subr.mxu0 0.0
        %1086 = vmatpush1.msra.mxu0 0.0
        %1087 = vmatprep.subr.mxu0 0.0
        %1088 = vmatpush1.msra.mxu0 0.0
        %1089 = vmatprep.subr.mxu0 0.0
        %1090 = vmatpush1.msra.mxu0 0.0
        %1091 = vmatprep.subr.mxu0 0.0
        %1092 = vmatpush1.msra.mxu0 0.0
        %1093 = vmatprep.subr.mxu0 0.0
        %1094 = vmatpush1.msra.mxu0 0.0
        %1095 = vmatprep.subr.mxu0 0.0
        %1096 = vmatpush1.msra.mxu0 0.0
        %1097 = vmatprep.subr.mxu0 0.0
        %1098 = vmatpush1.msra.mxu0 0.0
        %1099 = vmatprep.subr.mxu0 0.0
        %1100 = vmatpush1.msra.mxu0 0.0
        %1101 = vmatprep.subr.mxu0 0.0
        %1102 = vmatpush1.msra.mxu0 0.0
        %1103 = vmatprep.subr.mxu0 0.0
        %1104 = vmatpush1.msra.mxu0 0.0
        %1105 = vmatprep.subr.mxu0 0.0
        %1106 = vmatpush1.msra.mxu0 0.0
        %1107 = vmatprep.subr.mxu0 0.0
        %1108 = vmatpush1.msra.mxu0 0.0
        %1109 = vmatprep.subr.mxu0 0.0
        %1110 = vmatpush1.msra.mxu0 0.0
        %1111 = vmatprep.subr.mxu0 0.0
        %1112 = vmatpush1.msra.mxu0 0.0
        %1113 = vmatprep.subr.mxu0 0.0
        %1114 = vmatpush1.msra.mxu0 0.0
        %1115 = vmatprep.subr.mxu0 0.0
        %1116 = vmatpush1.msra.mxu0 0.0
        %1117 = vmatprep.subr.mxu0 0.0
        %1118 = vmatpush1.msra.mxu0 0.0
        %1119 = vmatprep.subr.mxu0 0.0
        %1120 = vmatpush1.msra.mxu0 0.0
        %1121 = vmatprep.mubr.f32.mxu0 0.0
        %1122 = vmatmul.mubr.f32.gmra.mrb[0].mxu0 %v1049
        %v1123 = vpop.f32.mrb[0].mxu0
        %v1124 = vadd.f32 0.0, %v1123
        %v1125 = vpop.f32.mrb[0].mxu0
        %v1126 = vadd.f32 0.0, %v1125
        %1127 = vdwg.mxu0
        %v1128 = vadd.f32 %v1022, %v1124
        %v1129 = vadd.f32 %v1023, %v1126
        %1130 = vrot.lane.b32.xlu0 %v304, 111
        %v1131 = vpop.permute.xlu0 %1130
        %1132 = vrot.lane.b32.xlu0 %v306, 111
        %v1133 = vpop.permute.xlu0 %1132
        %vm1134 = vcmp.lt.s32.totalorder %v313, 111
        %v1135 = vsel %vm1134, %v1131, %v1133
        %v1136 = vsel %vm1134, %v1133, %v1131
        %s1137 = scalar_lea.vmem %s0, 16
        %v1138 = vld [vmem:[%s1137] sm:$0x3]
        %v1140 = vlaneseq
        %v1141 = vshrl.u32 %v1140, 7
        %v1142 = vsub.s32 0, %v1141
        %v1143 = vrot.slane %v1138, %v1142
        %v1144 = vlaneseq
        %v1145 = vshrl.u32 %v1144, 7
        %v1146 = vsub.s32 1, %v1145
        %v1147 = vrot.slane %v1138, %v1146
        %v1150 = vmul.f32 %v1135, %v1143
        %v1151 = vmul.f32 %v1136, %v1147
        %s1152 = scalar_lea.vmem %s2, 64
        %v1153 = vld [vmem:[%s1152] sm:$0xff]
        %v1155 = vsel %vm356, %v1153, 0
        %v1158 = vsel %vm360, %v1150, 0
        %v1161 = vsel %vm360, %v1151, 0
        %1163 = vmatprep.subr.mxu0 %v1161
        %1164 = vmatpush1.msra.mxu0 %v1158
        %1165 = vmatprep.subr.mxu0 0.0
        %1166 = vmatpush1.msra.mxu0 0.0
        %1167 = vmatprep.subr.mxu0 0.0
        %1168 = vmatpush1.msra.mxu0 0.0
        %1169 = vmatprep.subr.mxu0 0.0
        %1170 = vmatpush1.msra.mxu0 0.0
        %1171 = vmatprep.subr.mxu0 0.0
        %1172 = vmatpush1.msra.mxu0 0.0
        %1173 = vmatprep.subr.mxu0 0.0
        %1174 = vmatpush1.msra.mxu0 0.0
        %1175 = vmatprep.subr.mxu0 0.0
        %1176 = vmatpush1.msra.mxu0 0.0
        %1177 = vmatprep.subr.mxu0 0.0
        %1178 = vmatpush1.msra.mxu0 0.0
        %1179 = vmatprep.subr.mxu0 0.0
        %1180 = vmatpush1.msra.mxu0 0.0
        %1181 = vmatprep.subr.mxu0 0.0
        %1182 = vmatpush1.msra.mxu0 0.0
        %1183 = vmatprep.subr.mxu0 0.0
        %1184 = vmatpush1.msra.mxu0 0.0
        %1185 = vmatprep.subr.mxu0 0.0
        %1186 = vmatpush1.msra.mxu0 0.0
        %1187 = vmatprep.subr.mxu0 0.0
        %1188 = vmatpush1.msra.mxu0 0.0
        %1189 = vmatprep.subr.mxu0 0.0
        %1190 = vmatpush1.msra.mxu0 0.0
        %1191 = vmatprep.subr.mxu0 0.0
        %1192 = vmatpush1.msra.mxu0 0.0
        %1193 = vmatprep.subr.mxu0 0.0
        %1194 = vmatpush1.msra.mxu0 0.0
        %1195 = vmatprep.subr.mxu0 0.0
        %1196 = vmatpush1.msra.mxu0 0.0
        %1197 = vmatprep.subr.mxu0 0.0
        %1198 = vmatpush1.msra.mxu0 0.0
        %1199 = vmatprep.subr.mxu0 0.0
        %1200 = vmatpush1.msra.mxu0 0.0
        %1201 = vmatprep.subr.mxu0 0.0
        %1202 = vmatpush1.msra.mxu0 0.0
        %1203 = vmatprep.subr.mxu0 0.0
        %1204 = vmatpush1.msra.mxu0 0.0
        %1205 = vmatprep.subr.mxu0 0.0
        %1206 = vmatpush1.msra.mxu0 0.0
        %1207 = vmatprep.subr.mxu0 0.0
        %1208 = vmatpush1.msra.mxu0 0.0
        %1209 = vmatprep.subr.mxu0 0.0
        %1210 = vmatpush1.msra.mxu0 0.0
        %1211 = vmatprep.subr.mxu0 0.0
        %1212 = vmatpush1.msra.mxu0 0.0
        %1213 = vmatprep.subr.mxu0 0.0
        %1214 = vmatpush1.msra.mxu0 0.0
        %1215 = vmatprep.subr.mxu0 0.0
        %1216 = vmatpush1.msra.mxu0 0.0
        %1217 = vmatprep.subr.mxu0 0.0
        %1218 = vmatpush1.msra.mxu0 0.0
        %1219 = vmatprep.subr.mxu0 0.0
        %1220 = vmatpush1.msra.mxu0 0.0
        %1221 = vmatprep.subr.mxu0 0.0
        %1222 = vmatpush1.msra.mxu0 0.0
        %1223 = vmatprep.subr.mxu0 0.0
        %1224 = vmatpush1.msra.mxu0 0.0
        %1225 = vmatprep.subr.mxu0 0.0
        %1226 = vmatpush1.msra.mxu0 0.0
        %1227 = vmatprep.mubr.f32.mxu0 0.0
        %1228 = vmatmul.mubr.f32.gmra.mrb[0].mxu0 %v1155
        %v1229 = vpop.f32.mrb[0].mxu0
        %v1230 = vadd.f32 0.0, %v1229
        %v1231 = vpop.f32.mrb[0].mxu0
        %v1232 = vadd.f32 0.0, %v1231
        %1233 = vdwg.mxu0
        %v1234 = vadd.f32 %v1128, %v1230
        %v1235 = vadd.f32 %v1129, %v1232
        %v1236 = vld [vmem:[%s3] sm:$0xff]
        %1238 = vset.pattern.permute.xlu0 0
        %1239 = vperm.xlu0 %1238, %v1236
        %v1240 = vpop.permute.xlu0 %1239
        %v1242 = vmul.f32 %v1234, %v1240
        %v1243 = vmul.f32 %v1235, %v1240
        %v1244 = vld [vmem:[%s4] sm:$0xff]
        %1246 = vset.pattern.permute.xlu0 0
        %1247 = vperm.xlu0 %1246, %v1244
        %v1248 = vpop.permute.xlu0 %1247
        %v1250 = vadd.f32 %v1242, %v1248
        %v1251 = vadd.f32 %v1243, %v1248
        %v1252 = vmax.f32 %v1250, 0.0
        %v1253 = vmax.f32 %v1251, 0.0
        %1254 = vrot.lane.b32.xlu0 %v1252, 17
        %v1255 = vpop.permute.xlu0 %1254
        %1256 = vrot.lane.b32.xlu0 %v1253, 17
        %v1257 = vpop.permute.xlu0 %1256
        %v1258 = vsel %vm314, %v1255, %v1257
        %v1259 = vsel %vm314, %v1257, %v1255
        %v1260 = vmul.f32 %v1259, %v322
        %v1261 = vmul.f32 %v1258, %v326
        %v1262 = vld [vmem:[%s5] sm:$0xff]
        %1263 = vrot.lane.b32.xlu0 %v1252, 16
        %v1264 = vpop.permute.xlu0 %1263
        %1265 = vrot.lane.b32.xlu0 %v1253, 16
        %v1266 = vpop.permute.xlu0 %1265
        %v1267 = vsel %vm336, %v1264, %v1266
        %v1268 = vsel %vm336, %v1266, %v1264
        %v1269 = vmul.f32 %v1268, %v345
        %v1270 = vmul.f32 %v1267, %v349
        %s1271 = scalar_lea.vmem %s5, 8
        %v1272 = vld [vmem:[%s1271] sm:$0xff]
        %vm1273 = vcmask 64512
        %v1275 = vsel %vm1273, %v1272, 0
        %1277 = vmatprep.subr.mxu0 %v1270
        %1278 = vmatpush1.msra.mxu0 %v1269
        %1279 = vmatprep.subr.mxu0 0.0
        %1280 = vmatpush1.msra.mxu0 0.0
        %1281 = vmatprep.subr.mxu0 0.0
        %1282 = vmatpush1.msra.mxu0 0.0
        %1283 = vmatprep.subr.mxu0 0.0
        %1284 = vmatpush1.msra.mxu0 0.0
        %1285 = vmatprep.subr.mxu0 0.0
        %1286 = vmatpush1.msra.mxu0 0.0
        %1287 = vmatprep.subr.mxu0 0.0
        %1288 = vmatpush1.msra.mxu0 0.0
        %1289 = vmatprep.subr.mxu0 0.0
        %1290 = vmatpush1.msra.mxu0 0.0
        %1291 = vmatprep.subr.mxu0 0.0
        %1292 = vmatpush1.msra.mxu0 0.0
        %1293 = vmatprep.subr.mxu0 0.0
        %1294 = vmatpush1.msra.mxu0 0.0
        %1295 = vmatprep.subr.mxu0 0.0
        %1296 = vmatpush1.msra.mxu0 0.0
        %1297 = vmatprep.subr.mxu0 0.0
        %1298 = vmatpush1.msra.mxu0 0.0
        %1299 = vmatprep.subr.mxu0 0.0
        %1300 = vmatpush1.msra.mxu0 0.0
        %1301 = vmatprep.subr.mxu0 0.0
        %1302 = vmatpush1.msra.mxu0 0.0
        %1303 = vmatprep.subr.mxu0 0.0
        %1304 = vmatpush1.msra.mxu0 0.0
        %1305 = vmatprep.subr.mxu0 0.0
        %1306 = vmatpush1.msra.mxu0 0.0
        %1307 = vmatprep.subr.mxu0 0.0
        %1308 = vmatpush1.msra.mxu0 0.0
        %1309 = vmatprep.subr.mxu0 0.0
        %1310 = vmatpush1.msra.mxu0 0.0
        %1311 = vmatprep.subr.mxu0 0.0
        %1312 = vmatpush1.msra.mxu0 0.0
        %1313 = vmatprep.subr.mxu0 0.0
        %1314 = vmatpush1.msra.mxu0 0.0
        %1315 = vmatprep.subr.mxu0 0.0
        %1316 = vmatpush1.msra.mxu0 0.0
        %1317 = vmatprep.subr.mxu0 0.0
        %1318 = vmatpush1.msra.mxu0 0.0
        %1319 = vmatprep.subr.mxu0 0.0
        %1320 = vmatpush1.msra.mxu0 0.0
        %1321 = vmatprep.subr.mxu0 0.0
        %1322 = vmatpush1.msra.mxu0 0.0
        %1323 = vmatprep.subr.mxu0 0.0
        %1324 = vmatpush1.msra.mxu0 0.0
        %1325 = vmatprep.subr.mxu0 0.0
        %1326 = vmatpush1.msra.mxu0 0.0
        %1327 = vmatprep.subr.mxu0 0.0
        %1328 = vmatpush1.msra.mxu0 0.0
        %1329 = vmatprep.subr.mxu0 0.0
        %1330 = vmatpush1.msra.mxu0 0.0
        %1331 = vmatprep.subr.mxu0 0.0
        %1332 = vmatpush1.msra.mxu0 0.0
        %1333 = vmatprep.subr.mxu0 0.0
        %1334 = vmatpush1.msra.mxu0 0.0
        %1335 = vmatprep.subr.mxu0 0.0
        %1336 = vmatpush1.msra.mxu0 0.0
        %1337 = vmatprep.subr.mxu0 0.0
        %1338 = vmatpush1.msra.mxu0 0.0
        %1339 = vmatprep.subr.mxu0 0.0
        %1340 = vmatpush1.msra.mxu0 0.0
        %1341 = vmatprep.mubr.f32.mxu0 0.0
        %1342 = vmatmul.mubr.f32.gmra.mrb[0].mxu0 %v1275
        %v1343 = vpop.f32.mrb[0].mxu0
        %v1344 = vadd.f32 0.0, %v1343
        %v1345 = vpop.f32.mrb[0].mxu0
        %v1346 = vadd.f32 0.0, %v1345
        %1347 = vdwg.mxu0
        %v1349 = vsel %vm1273, %v1262, 0
        %1351 = vmatprep.subr.mxu0 %v1261
        %1352 = vmatpush1.msra.mxu0 %v1260
        %1353 = vmatprep.subr.mxu0 0.0
        %1354 = vmatpush1.msra.mxu0 0.0
        %1355 = vmatprep.subr.mxu0 0.0
        %1356 = vmatpush1.msra.mxu0 0.0
        %1357 = vmatprep.subr.mxu0 0.0
        %1358 = vmatpush1.msra.mxu0 0.0
        %1359 = vmatprep.subr.mxu0 0.0
        %1360 = vmatpush1.msra.mxu0 0.0
        %1361 = vmatprep.subr.mxu0 0.0
        %1362 = vmatpush1.msra.mxu0 0.0
        %1363 = vmatprep.subr.mxu0 0.0
        %1364 = vmatpush1.msra.mxu0 0.0
        %1365 = vmatprep.subr.mxu0 0.0
        %1366 = vmatpush1.msra.mxu0 0.0
        %1367 = vmatprep.subr.mxu0 0.0
        %1368 = vmatpush1.msra.mxu0 0.0
        %1369 = vmatprep.subr.mxu0 0.0
        %1370 = vmatpush1.msra.mxu0 0.0
        %1371 = vmatprep.subr.mxu0 0.0
        %1372 = vmatpush1.msra.mxu0 0.0
        %1373 = vmatprep.subr.mxu0 0.0
        %1374 = vmatpush1.msra.mxu0 0.0
        %1375 = vmatprep.subr.mxu0 0.0
        %1376 = vmatpush1.msra.mxu0 0.0
        %1377 = vmatprep.subr.mxu0 0.0
        %1378 = vmatpush1.msra.mxu0 0.0
        %1379 = vmatprep.subr.mxu0 0.0
        %1380 = vmatpush1.msra.mxu0 0.0
        %1381 = vmatprep.subr.mxu0 0.0
        %1382 = vmatpush1.msra.mxu0 0.0
        %1383 = vmatprep.subr.mxu0 0.0
        %1384 = vmatpush1.msra.mxu0 0.0
        %1385 = vmatprep.subr.mxu0 0.0
        %1386 = vmatpush1.msra.mxu0 0.0
        %1387 = vmatprep.subr.mxu0 0.0
        %1388 = vmatpush1.msra.mxu0 0.0
        %1389 = vmatprep.subr.mxu0 0.0
        %1390 = vmatpush1.msra.mxu0 0.0
        %1391 = vmatprep.subr.mxu0 0.0
        %1392 = vmatpush1.msra.mxu0 0.0
        %1393 = vmatprep.subr.mxu0 0.0
        %1394 = vmatpush1.msra.mxu0 0.0
        %1395 = vmatprep.subr.mxu0 0.0
        %1396 = vmatpush1.msra.mxu0 0.0
        %1397 = vmatprep.subr.mxu0 0.0
        %1398 = vmatpush1.msra.mxu0 0.0
        %1399 = vmatprep.subr.mxu0 0.0
        %1400 = vmatpush1.msra.mxu0 0.0
        %1401 = vmatprep.subr.mxu0 0.0
        %1402 = vmatpush1.msra.mxu0 0.0
        %1403 = vmatprep.subr.mxu0 0.0
        %1404 = vmatpush1.msra.mxu0 0.0
        %1405 = vmatprep.subr.mxu0 0.0
        %1406 = vmatpush1.msra.mxu0 0.0
        %1407 = vmatprep.subr.mxu0 0.0
        %1408 = vmatpush1.msra.mxu0 0.0
        %1409 = vmatprep.subr.mxu0 0.0
        %1410 = vmatpush1.msra.mxu0 0.0
        %1411 = vmatprep.subr.mxu0 0.0
        %1412 = vmatpush1.msra.mxu0 0.0
        %1413 = vmatprep.subr.mxu0 0.0
        %1414 = vmatpush1.msra.mxu0 0.0
        %1415 = vmatprep.mubr.f32.mxu0 0.0
        %1416 = vmatmul.mubr.f32.gmra.mrb[0].mxu0 %v1349
        %v1417 = vpop.f32.mrb[0].mxu0
        %v1418 = vadd.f32 %v1344, %v1417
        %v1419 = vpop.f32.mrb[0].mxu0
        %v1420 = vadd.f32 %v1346, %v1419
        %1421 = vdwg.mxu0
        %1422 = vrot.lane.b32.xlu0 %v1252, 15
        %v1423 = vpop.permute.xlu0 %1422
        %1424 = vrot.lane.b32.xlu0 %v1253, 15
        %v1425 = vpop.permute.xlu0 %1424
        %v1426 = vsel %vm522, %v1423, %v1425
        %v1427 = vsel %vm522, %v1425, %v1423
        %v1428 = vmul.f32 %v1427, %v531
        %v1429 = vmul.f32 %v1426, %v535
        %s1430 = scalar_lea.vmem %s5, 16
        %v1431 = vld [vmem:[%s1430] sm:$0xff]
        %v1433 = vsel %vm1273, %v1431, 0
        %1435 = vmatprep.subr.mxu0 %v1429
        %1436 = vmatpush1.msra.mxu0 %v1428
        %1437 = vmatprep.subr.mxu0 0.0
        %1438 = vmatpush1.msra.mxu0 0.0
        %1439 = vmatprep.subr.mxu0 0.0
        %1440 = vmatpush1.msra.mxu0 0.0
        %1441 = vmatprep.subr.mxu0 0.0
        %1442 = vmatpush1.msra.mxu0 0.0
        %1443 = vmatprep.subr.mxu0 0.0
        %1444 = vmatpush1.msra.mxu0 0.0
        %1445 = vmatprep.subr.mxu0 0.0
        %1446 = vmatpush1.msra.mxu0 0.0
        %1447 = vmatprep.subr.mxu0 0.0
        %1448 = vmatpush1.msra.mxu0 0.0
        %1449 = vmatprep.subr.mxu0 0.0
        %1450 = vmatpush1.msra.mxu0 0.0
        %1451 = vmatprep.subr.mxu0 0.0
        %1452 = vmatpush1.msra.mxu0 0.0
        %1453 = vmatprep.subr.mxu0 0.0
        %1454 = vmatpush1.msra.mxu0 0.0
        %1455 = vmatprep.subr.mxu0 0.0
        %1456 = vmatpush1.msra.mxu0 0.0
        %1457 = vmatprep.subr.mxu0 0.0
        %1458 = vmatpush1.msra.mxu0 0.0
        %1459 = vmatprep.subr.mxu0 0.0
        %1460 = vmatpush1.msra.mxu0 0.0
        %1461 = vmatprep.subr.mxu0 0.0
        %1462 = vmatpush1.msra.mxu0 0.0
        %1463 = vmatprep.subr.mxu0 0.0
        %1464 = vmatpush1.msra.mxu0 0.0
        %1465 = vmatprep.subr.mxu0 0.0
        %1466 = vmatpush1.msra.mxu0 0.0
        %1467 = vmatprep.subr.mxu0 0.0
        %1468 = vmatpush1.msra.mxu0 0.0
        %1469 = vmatprep.subr.mxu0 0.0
        %1470 = vmatpush1.msra.mxu0 0.0
        %1471 = vmatprep.subr.mxu0 0.0
        %1472 = vmatpush1.msra.mxu0 0.0
        %1473 = vmatprep.subr.mxu0 0.0
        %1474 = vmatpush1.msra.mxu0 0.0
        %1475 = vmatprep.subr.mxu0 0.0
        %1476 = vmatpush1.msra.mxu0 0.0
        %1477 = vmatprep.subr.mxu0 0.0
        %1478 = vmatpush1.msra.mxu0 0.0
        %1479 = vmatprep.subr.mxu0 0.0
        %1480 = vmatpush1.msra.mxu0 0.0
        %1481 = vmatprep.subr.mxu0 0.0
        %1482 = vmatpush1.msra.mxu0 0.0
        %1483 = vmatprep.subr.mxu0 0.0
        %1484 = vmatpush1.msra.mxu0 0.0
        %1485 = vmatprep.subr.mxu0 0.0
        %1486 = vmatpush1.msra.mxu0 0.0
        %1487 = vmatprep.subr.mxu0 0.0
        %1488 = vmatpush1.msra.mxu0 0.0
        %1489 = vmatprep.subr.mxu0 0.0
        %1490 = vmatpush1.msra.mxu0 0.0
        %1491 = vmatprep.subr.mxu0 0.0
        %1492 = vmatpush1.msra.mxu0 0.0
        %1493 = vmatprep.subr.mxu0 0.0
        %1494 = vmatpush1.msra.mxu0 0.0
        %1495 = vmatprep.subr.mxu0 0.0
        %1496 = vmatpush1.msra.mxu0 0.0
        %1497 = vmatprep.subr.mxu0 0.0
        %1498 = vmatpush1.msra.mxu0 0.0
        %1499 = vmatprep.mubr.f32.mxu0 0.0
        %1500 = vmatmul.mubr.f32.gmra.mrb[0].mxu0 %v1433
        %v1501 = vpop.f32.mrb[0].mxu0
        %v1502 = vadd.f32 0.0, %v1501
        %v1503 = vpop.f32.mrb[0].mxu0
        %v1504 = vadd.f32 0.0, %v1503
        %1505 = vdwg.mxu0
        %v1506 = vadd.f32 %v1418, %v1502
        %v1507 = vadd.f32 %v1420, %v1504
        %1508 = vrot.lane.b32.xlu0 %v1252, 1
        %v1509 = vpop.permute.xlu0 %1508
        %1510 = vrot.lane.b32.xlu0 %v1253, 1
        %v1511 = vpop.permute.xlu0 %1510
        %v1512 = vsel %vm628, %v1509, %v1511
        %v1513 = vsel %vm628, %v1511, %v1509
        %v1514 = vmul.f32 %v1513, %v637
        %v1515 = vmul.f32 %v1512, %v641
        %s1516 = scalar_lea.vmem %s5, 24
        %v1517 = vld [vmem:[%s1516] sm:$0xff]
        %v1519 = vsel %vm1273, %v1517, 0
        %1521 = vmatprep.subr.mxu0 %v1515
        %1522 = vmatpush1.msra.mxu0 %v1514
        %1523 = vmatprep.subr.mxu0 0.0
        %1524 = vmatpush1.msra.mxu0 0.0
        %1525 = vmatprep.subr.mxu0 0.0
        %1526 = vmatpush1.msra.mxu0 0.0
        %1527 = vmatprep.subr.mxu0 0.0
        %1528 = vmatpush1.msra.mxu0 0.0
        %1529 = vmatprep.subr.mxu0 0.0
        %1530 = vmatpush1.msra.mxu0 0.0
        %1531 = vmatprep.subr.mxu0 0.0
        %1532 = vmatpush1.msra.mxu0 0.0
        %1533 = vmatprep.subr.mxu0 0.0
        %1534 = vmatpush1.msra.mxu0 0.0
        %1535 = vmatprep.subr.mxu0 0.0
        %1536 = vmatpush1.msra.mxu0 0.0
        %1537 = vmatprep.subr.mxu0 0.0
        %1538 = vmatpush1.msra.mxu0 0.0
        %1539 = vmatprep.subr.mxu0 0.0
        %1540 = vmatpush1.msra.mxu0 0.0
        %1541 = vmatprep.subr.mxu0 0.0
        %1542 = vmatpush1.msra.mxu0 0.0
        %1543 = vmatprep.subr.mxu0 0.0
        %1544 = vmatpush1.msra.mxu0 0.0
        %1545 = vmatprep.subr.mxu0 0.0
        %1546 = vmatpush1.msra.mxu0 0.0
        %1547 = vmatprep.subr.mxu0 0.0
        %1548 = vmatpush1.msra.mxu0 0.0
        %1549 = vmatprep.subr.mxu0 0.0
        %1550 = vmatpush1.msra.mxu0 0.0
        %1551 = vmatprep.subr.mxu0 0.0
        %1552 = vmatpush1.msra.mxu0 0.0
        %1553 = vmatprep.subr.mxu0 0.0
        %1554 = vmatpush1.msra.mxu0 0.0
        %1555 = vmatprep.subr.mxu0 0.0
        %1556 = vmatpush1.msra.mxu0 0.0
        %1557 = vmatprep.subr.mxu0 0.0
        %1558 = vmatpush1.msra.mxu0 0.0
        %1559 = vmatprep.subr.mxu0 0.0
        %1560 = vmatpush1.msra.mxu0 0.0
        %1561 = vmatprep.subr.mxu0 0.0
        %1562 = vmatpush1.msra.mxu0 0.0
        %1563 = vmatprep.subr.mxu0 0.0
        %1564 = vmatpush1.msra.mxu0 0.0
        %1565 = vmatprep.subr.mxu0 0.0
        %1566 = vmatpush1.msra.mxu0 0.0
        %1567 = vmatprep.subr.mxu0 0.0
        %1568 = vmatpush1.msra.mxu0 0.0
        %1569 = vmatprep.subr.mxu0 0.0
        %1570 = vmatpush1.msra.mxu0 0.0
        %1571 = vmatprep.subr.mxu0 0.0
        %1572 = vmatpush1.msra.mxu0 0.0
        %1573 = vmatprep.subr.mxu0 0.0
        %1574 = vmatpush1.msra.mxu0 0.0
        %1575 = vmatprep.subr.mxu0 0.0
        %1576 = vmatpush1.msra.mxu0 0.0
        %1577 = vmatprep.subr.mxu0 0.0
        %1578 = vmatpush1.msra.mxu0 0.0
        %1579 = vmatprep.subr.mxu0 0.0
        %1580 = vmatpush1.msra.mxu0 0.0
        %1581 = vmatprep.subr.mxu0 0.0
        %1582 = vmatpush1.msra.mxu0 0.0
        %1583 = vmatprep.subr.mxu0 0.0
        %1584 = vmatpush1.msra.mxu0 0.0
        %1585 = vmatprep.mubr.f32.mxu0 0.0
        %1586 = vmatmul.mubr.f32.gmra.mrb[0].mxu0 %v1519
        %v1587 = vpop.f32.mrb[0].mxu0
        %v1588 = vadd.f32 0.0, %v1587
        %v1589 = vpop.f32.mrb[0].mxu0
        %v1590 = vadd.f32 0.0, %v1589
        %1591 = vdwg.mxu0
        %v1592 = vadd.f32 %v1506, %v1588
        %v1593 = vadd.f32 %v1507, %v1590
        %s1594 = scalar_lea.vmem %s5, 32
        %v1595 = vld [vmem:[%s1594] sm:$0xff]
        %v1597 = vsel %vm1273, %v1595, 0
        %1599 = vmatprep.subr.mxu0 %v1253
        %1600 = vmatpush1.msra.mxu0 %v1252
        %1601 = vmatprep.subr.mxu0 0.0
        %1602 = vmatpush1.msra.mxu0 0.0
        %1603 = vmatprep.subr.mxu0 0.0
        %1604 = vmatpush1.msra.mxu0 0.0
        %1605 = vmatprep.subr.mxu0 0.0
        %1606 = vmatpush1.msra.mxu0 0.0
        %1607 = vmatprep.subr.mxu0 0.0
        %1608 = vmatpush1.msra.mxu0 0.0
        %1609 = vmatprep.subr.mxu0 0.0
        %1610 = vmatpush1.msra.mxu0 0.0
        %1611 = vmatprep.subr.mxu0 0.0
        %1612 = vmatpush1.msra.mxu0 0.0
        %1613 = vmatprep.subr.mxu0 0.0
        %1614 = vmatpush1.msra.mxu0 0.0
        %1615 = vmatprep.subr.mxu0 0.0
        %1616 = vmatpush1.msra.mxu0 0.0
        %1617 = vmatprep.subr.mxu0 0.0
        %1618 = vmatpush1.msra.mxu0 0.0
        %1619 = vmatprep.subr.mxu0 0.0
        %1620 = vmatpush1.msra.mxu0 0.0
        %1621 = vmatprep.subr.mxu0 0.0
        %1622 = vmatpush1.msra.mxu0 0.0
        %1623 = vmatprep.subr.mxu0 0.0
        %1624 = vmatpush1.msra.mxu0 0.0
        %1625 = vmatprep.subr.mxu0 0.0
        %1626 = vmatpush1.msra.mxu0 0.0
        %1627 = vmatprep.subr.mxu0 0.0
        %1628 = vmatpush1.msra.mxu0 0.0
        %1629 = vmatprep.subr.mxu0 0.0
        %1630 = vmatpush1.msra.mxu0 0.0
        %1631 = vmatprep.subr.mxu0 0.0
        %1632 = vmatpush1.msra.mxu0 0.0
        %1633 = vmatprep.subr.mxu0 0.0
        %1634 = vmatpush1.msra.mxu0 0.0
        %1635 = vmatprep.subr.mxu0 0.0
        %1636 = vmatpush1.msra.mxu0 0.0
        %1637 = vmatprep.subr.mxu0 0.0
        %1638 = vmatpush1.msra.mxu0 0.0
        %1639 = vmatprep.subr.mxu0 0.0
        %1640 = vmatpush1.msra.mxu0 0.0
        %1641 = vmatprep.subr.mxu0 0.0
        %1642 = vmatpush1.msra.mxu0 0.0
        %1643 = vmatprep.subr.mxu0 0.0
        %1644 = vmatpush1.msra.mxu0 0.0
        %1645 = vmatprep.subr.mxu0 0.0
        %1646 = vmatpush1.msra.mxu0 0.0
        %1647 = vmatprep.subr.mxu0 0.0
        %1648 = vmatpush1.msra.mxu0 0.0
        %1649 = vmatprep.subr.mxu0 0.0
        %1650 = vmatpush1.msra.mxu0 0.0
        %1651 = vmatprep.subr.mxu0 0.0
        %1652 = vmatpush1.msra.mxu0 0.0
        %1653 = vmatprep.subr.mxu0 0.0
        %1654 = vmatpush1.msra.mxu0 0.0
        %1655 = vmatprep.subr.mxu0 0.0
        %1656 = vmatpush1.msra.mxu0 0.0
        %1657 = vmatprep.subr.mxu0 0.0
        %1658 = vmatpush1.msra.mxu0 0.0
        %1659 = vmatprep.subr.mxu0 0.0
        %1660 = vmatpush1.msra.mxu0 0.0
        %1661 = vmatprep.subr.mxu0 0.0
        %1662 = vmatpush1.msra.mxu0 0.0
        %1663 = vmatprep.mubr.f32.mxu0 0.0
        %1664 = vmatmul.mubr.f32.gmra.mrb[0].mxu0 %v1597
        %v1665 = vpop.f32.mrb[0].mxu0
        %v1666 = vadd.f32 0.0, %v1665
        %v1667 = vpop.f32.mrb[0].mxu0
        %v1668 = vadd.f32 0.0, %v1667
        %1669 = vdwg.mxu0
        %v1670 = vadd.f32 %v1592, %v1666
        %v1671 = vadd.f32 %v1593, %v1668
        %1672 = vrot.lane.b32.xlu0 %v1252, 127
        %v1673 = vpop.permute.xlu0 %1672
        %1674 = vrot.lane.b32.xlu0 %v1253, 127
        %v1675 = vpop.permute.xlu0 %1674
        %v1676 = vsel %vm816, %v1673, %v1675
        %v1677 = vsel %vm816, %v1675, %v1673
        %v1678 = vmul.f32 %v1676, %v825
        %v1679 = vmul.f32 %v1677, %v829
        %s1680 = scalar_lea.vmem %s5, 40
        %v1681 = vld [vmem:[%s1680] sm:$0xff]
        %v1683 = vsel %vm1273, %v1681, 0
        %1685 = vmatprep.subr.mxu0 %v1679
        %1686 = vmatpush1.msra.mxu0 %v1678
        %1687 = vmatprep.subr.mxu0 0.0
        %1688 = vmatpush1.msra.mxu0 0.0
        %1689 = vmatprep.subr.mxu0 0.0
        %1690 = vmatpush1.msra.mxu0 0.0
        %1691 = vmatprep.subr.mxu0 0.0
        %1692 = vmatpush1.msra.mxu0 0.0
        %1693 = vmatprep.subr.mxu0 0.0
        %1694 = vmatpush1.msra.mxu0 0.0
        %1695 = vmatprep.subr.mxu0 0.0
        %1696 = vmatpush1.msra.mxu0 0.0
        %1697 = vmatprep.subr.mxu0 0.0
        %1698 = vmatpush1.msra.mxu0 0.0
        %1699 = vmatprep.subr.mxu0 0.0
        %1700 = vmatpush1.msra.mxu0 0.0
        %1701 = vmatprep.subr.mxu0 0.0
        %1702 = vmatpush1.msra.mxu0 0.0
        %1703 = vmatprep.subr.mxu0 0.0
        %1704 = vmatpush1.msra.mxu0 0.0
        %1705 = vmatprep.subr.mxu0 0.0
        %1706 = vmatpush1.msra.mxu0 0.0
        %1707 = vmatprep.subr.mxu0 0.0
        %1708 = vmatpush1.msra.mxu0 0.0
        %1709 = vmatprep.subr.mxu0 0.0
        %1710 = vmatpush1.msra.mxu0 0.0
        %1711 = vmatprep.subr.mxu0 0.0
        %1712 = vmatpush1.msra.mxu0 0.0
        %1713 = vmatprep.subr.mxu0 0.0
        %1714 = vmatpush1.msra.mxu0 0.0
        %1715 = vmatprep.subr.mxu0 0.0
        %1716 = vmatpush1.msra.mxu0 0.0
        %1717 = vmatprep.subr.mxu0 0.0
        %1718 = vmatpush1.msra.mxu0 0.0
        %1719 = vmatprep.subr.mxu0 0.0
        %1720 = vmatpush1.msra.mxu0 0.0
        %1721 = vmatprep.subr.mxu0 0.0
        %1722 = vmatpush1.msra.mxu0 0.0
        %1723 = vmatprep.subr.mxu0 0.0
        %1724 = vmatpush1.msra.mxu0 0.0
        %1725 = vmatprep.subr.mxu0 0.0
        %1726 = vmatpush1.msra.mxu0 0.0
        %1727 = vmatprep.subr.mxu0 0.0
        %1728 = vmatpush1.msra.mxu0 0.0
        %1729 = vmatprep.subr.mxu0 0.0
        %1730 = vmatpush1.msra.mxu0 0.0
        %1731 = vmatprep.subr.mxu0 0.0
        %1732 = vmatpush1.msra.mxu0 0.0
        %1733 = vmatprep.subr.mxu0 0.0
        %1734 = vmatpush1.msra.mxu0 0.0
        %1735 = vmatprep.subr.mxu0 0.0
        %1736 = vmatpush1.msra.mxu0 0.0
        %1737 = vmatprep.subr.mxu0 0.0
        %1738 = vmatpush1.msra.mxu0 0.0
        %1739 = vmatprep.subr.mxu0 0.0
        %1740 = vmatpush1.msra.mxu0 0.0
        %1741 = vmatprep.subr.mxu0 0.0
        %1742 = vmatpush1.msra.mxu0 0.0
        %1743 = vmatprep.subr.mxu0 0.0
        %1744 = vmatpush1.msra.mxu0 0.0
        %1745 = vmatprep.subr.mxu0 0.0
        %1746 = vmatpush1.msra.mxu0 0.0
        %1747 = vmatprep.subr.mxu0 0.0
        %1748 = vmatpush1.msra.mxu0 0.0
        %1749 = vmatprep.mubr.f32.mxu0 0.0
        %1750 = vmatmul.mubr.f32.gmra.mrb[0].mxu0 %v1683
        %v1751 = vpop.f32.mrb[0].mxu0
        %v1752 = vadd.f32 0.0, %v1751
        %v1753 = vpop.f32.mrb[0].mxu0
        %v1754 = vadd.f32 0.0, %v1753
        %1755 = vdwg.mxu0
        %v1756 = vadd.f32 %v1670, %v1752
        %v1757 = vadd.f32 %v1671, %v1754
        %1758 = vrot.lane.b32.xlu0 %v1252, 113
        %v1759 = vpop.permute.xlu0 %1758
        %1760 = vrot.lane.b32.xlu0 %v1253, 113
        %v1761 = vpop.permute.xlu0 %1760
        %v1762 = vsel %vm922, %v1759, %v1761
        %v1763 = vsel %vm922, %v1761, %v1759
        %v1764 = vmul.f32 %v1762, %v931
        %v1765 = vmul.f32 %v1763, %v935
        %s1766 = scalar_lea.vmem %s5, 48
        %v1767 = vld [vmem:[%s1766] sm:$0xff]
        %v1769 = vsel %vm1273, %v1767, 0
        %1771 = vmatprep.subr.mxu0 %v1765
        %1772 = vmatpush1.msra.mxu0 %v1764
        %1773 = vmatprep.subr.mxu0 0.0
        %1774 = vmatpush1.msra.mxu0 0.0
        %1775 = vmatprep.subr.mxu0 0.0
        %1776 = vmatpush1.msra.mxu0 0.0
        %1777 = vmatprep.subr.mxu0 0.0
        %1778 = vmatpush1.msra.mxu0 0.0
        %1779 = vmatprep.subr.mxu0 0.0
        %1780 = vmatpush1.msra.mxu0 0.0
        %1781 = vmatprep.subr.mxu0 0.0
        %1782 = vmatpush1.msra.mxu0 0.0
        %1783 = vmatprep.subr.mxu0 0.0
        %1784 = vmatpush1.msra.mxu0 0.0
        %1785 = vmatprep.subr.mxu0 0.0
        %1786 = vmatpush1.msra.mxu0 0.0
        %1787 = vmatprep.subr.mxu0 0.0
        %1788 = vmatpush1.msra.mxu0 0.0
        %1789 = vmatprep.subr.mxu0 0.0
        %1790 = vmatpush1.msra.mxu0 0.0
        %1791 = vmatprep.subr.mxu0 0.0
        %1792 = vmatpush1.msra.mxu0 0.0
        %1793 = vmatprep.subr.mxu0 0.0
        %1794 = vmatpush1.msra.mxu0 0.0
        %1795 = vmatprep.subr.mxu0 0.0
        %1796 = vmatpush1.msra.mxu0 0.0
        %1797 = vmatprep.subr.mxu0 0.0
        %1798 = vmatpush1.msra.mxu0 0.0
        %1799 = vmatprep.subr.mxu0 0.0
        %1800 = vmatpush1.msra.mxu0 0.0
        %1801 = vmatprep.subr.mxu0 0.0
        %1802 = vmatpush1.msra.mxu0 0.0
        %1803 = vmatprep.subr.mxu0 0.0
        %1804 = vmatpush1.msra.mxu0 0.0
        %1805 = vmatprep.subr.mxu0 0.0
        %1806 = vmatpush1.msra.mxu0 0.0
        %1807 = vmatprep.subr.mxu0 0.0
        %1808 = vmatpush1.msra.mxu0 0.0
        %1809 = vmatprep.subr.mxu0 0.0
        %1810 = vmatpush1.msra.mxu0 0.0
        %1811 = vmatprep.subr.mxu0 0.0
        %1812 = vmatpush1.msra.mxu0 0.0
        %1813 = vmatprep.subr.mxu0 0.0
        %1814 = vmatpush1.msra.mxu0 0.0
        %1815 = vmatprep.subr.mxu0 0.0
        %1816 = vmatpush1.msra.mxu0 0.0
        %1817 = vmatprep.subr.mxu0 0.0
        %1818 = vmatpush1.msra.mxu0 0.0
        %1819 = vmatprep.subr.mxu0 0.0
        %1820 = vmatpush1.msra.mxu0 0.0
        %1821 = vmatprep.subr.mxu0 0.0
        %1822 = vmatpush1.msra.mxu0 0.0
        %1823 = vmatprep.subr.mxu0 0.0
        %1824 = vmatpush1.msra.mxu0 0.0
        %1825 = vmatprep.subr.mxu0 0.0
        %1826 = vmatpush1.msra.mxu0 0.0
        %1827 = vmatprep.subr.mxu0 0.0
        %1828 = vmatpush1.msra.mxu0 0.0
        %1829 = vmatprep.subr.mxu0 0.0
        %1830 = vmatpush1.msra.mxu0 0.0
        %1831 = vmatprep.subr.mxu0 0.0
        %1832 = vmatpush1.msra.mxu0 0.0
        %1833 = vmatprep.subr.mxu0 0.0
        %1834 = vmatpush1.msra.mxu0 0.0
        %1835 = vmatprep.mubr.f32.mxu0 0.0
        %1836 = vmatmul.mubr.f32.gmra.mrb[0].mxu0 %v1769
        %v1837 = vpop.f32.mrb[0].mxu0
        %v1838 = vadd.f32 0.0, %v1837
        %v1839 = vpop.f32.mrb[0].mxu0
        %v1840 = vadd.f32 0.0, %v1839
        %1841 = vdwg.mxu0
        %v1842 = vadd.f32 %v1756, %v1838
        %v1843 = vadd.f32 %v1757, %v1840
        %1844 = vrot.lane.b32.xlu0 %v1252, 112
        %v1845 = vpop.permute.xlu0 %1844
        %1846 = vrot.lane.b32.xlu0 %v1253, 112
        %v1847 = vpop.permute.xlu0 %1846
        %v1848 = vsel %vm1028, %v1845, %v1847
        %v1849 = vsel %vm1028, %v1847, %v1845
        %v1850 = vmul.f32 %v1848, %v1037
        %v1851 = vmul.f32 %v1849, %v1041
        %s1852 = scalar_lea.vmem %s5, 56
        %v1853 = vld [vmem:[%s1852] sm:$0xff]
        %v1855 = vsel %vm1273, %v1853, 0
        %1857 = vmatprep.subr.mxu0 %v1851
        %1858 = vmatpush1.msra.mxu0 %v1850
        %1859 = vmatprep.subr.mxu0 0.0
        %1860 = vmatpush1.msra.mxu0 0.0
        %1861 = vmatprep.subr.mxu0 0.0
        %1862 = vmatpush1.msra.mxu0 0.0
        %1863 = vmatprep.subr.mxu0 0.0
        %1864 = vmatpush1.msra.mxu0 0.0
        %1865 = vmatprep.subr.mxu0 0.0
        %1866 = vmatpush1.msra.mxu0 0.0
        %1867 = vmatprep.subr.mxu0 0.0
        %1868 = vmatpush1.msra.mxu0 0.0
        %1869 = vmatprep.subr.mxu0 0.0
        %1870 = vmatpush1.msra.mxu0 0.0
        %1871 = vmatprep.subr.mxu0 0.0
        %1872 = vmatpush1.msra.mxu0 0.0
        %1873 = vmatprep.subr.mxu0 0.0
        %1874 = vmatpush1.msra.mxu0 0.0
        %1875 = vmatprep.subr.mxu0 0.0
        %1876 = vmatpush1.msra.mxu0 0.0
        %1877 = vmatprep.subr.mxu0 0.0
        %1878 = vmatpush1.msra.mxu0 0.0
        %1879 = vmatprep.subr.mxu0 0.0
        %1880 = vmatpush1.msra.mxu0 0.0
        %1881 = vmatprep.subr.mxu0 0.0
        %1882 = vmatpush1.msra.mxu0 0.0
        %1883 = vmatprep.subr.mxu0 0.0
        %1884 = vmatpush1.msra.mxu0 0.0
        %1885 = vmatprep.subr.mxu0 0.0
        %1886 = vmatpush1.msra.mxu0 0.0
        %1887 = vmatprep.subr.mxu0 0.0
        %1888 = vmatpush1.msra.mxu0 0.0
        %1889 = vmatprep.subr.mxu0 0.0
        %1890 = vmatpush1.msra.mxu0 0.0
        %1891 = vmatprep.subr.mxu0 0.0
        %1892 = vmatpush1.msra.mxu0 0.0
        %1893 = vmatprep.subr.mxu0 0.0
        %1894 = vmatpush1.msra.mxu0 0.0
        %1895 = vmatprep.subr.mxu0 0.0
        %1896 = vmatpush1.msra.mxu0 0.0
        %1897 = vmatprep.subr.mxu0 0.0
        %1898 = vmatpush1.msra.mxu0 0.0
        %1899 = vmatprep.subr.mxu0 0.0
        %1900 = vmatpush1.msra.mxu0 0.0
        %1901 = vmatprep.subr.mxu0 0.0
        %1902 = vmatpush1.msra.mxu0 0.0
        %1903 = vmatprep.subr.mxu0 0.0
        %1904 = vmatpush1.msra.mxu0 0.0
        %1905 = vmatprep.subr.mxu0 0.0
        %1906 = vmatpush1.msra.mxu0 0.0
        %1907 = vmatprep.subr.mxu0 0.0
        %1908 = vmatpush1.msra.mxu0 0.0
        %1909 = vmatprep.subr.mxu0 0.0
        %1910 = vmatpush1.msra.mxu0 0.0
        %1911 = vmatprep.subr.mxu0 0.0
        %1912 = vmatpush1.msra.mxu0 0.0
        %1913 = vmatprep.subr.mxu0 0.0
        %1914 = vmatpush1.msra.mxu0 0.0
        %1915 = vmatprep.subr.mxu0 0.0
        %1916 = vmatpush1.msra.mxu0 0.0
        %1917 = vmatprep.subr.mxu0 0.0
        %1918 = vmatpush1.msra.mxu0 0.0
        %1919 = vmatprep.subr.mxu0 0.0
        %1920 = vmatpush1.msra.mxu0 0.0
        %1921 = vmatprep.mubr.f32.mxu0 0.0
        %1922 = vmatmul.mubr.f32.gmra.mrb[0].mxu0 %v1855
        %v1923 = vpop.f32.mrb[0].mxu0
        %v1924 = vadd.f32 0.0, %v1923
        %v1925 = vpop.f32.mrb[0].mxu0
        %v1926 = vadd.f32 0.0, %v1925
        %1927 = vdwg.mxu0
        %v1928 = vadd.f32 %v1842, %v1924
        %v1929 = vadd.f32 %v1843, %v1926
        %1930 = vrot.lane.b32.xlu0 %v1252, 111
        %v1931 = vpop.permute.xlu0 %1930
        %1932 = vrot.lane.b32.xlu0 %v1253, 111
        %v1933 = vpop.permute.xlu0 %1932
        %v1934 = vsel %vm1134, %v1931, %v1933
        %v1935 = vsel %vm1134, %v1933, %v1931
        %v1936 = vmul.f32 %v1934, %v1143
        %v1937 = vmul.f32 %v1935, %v1147
        %s1938 = scalar_lea.vmem %s5, 64
        %v1939 = vld [vmem:[%s1938] sm:$0xff]
        %v1941 = vsel %vm1273, %v1939, 0
        %1943 = vmatprep.subr.mxu0 %v1937
        %1944 = vmatpush1.msra.mxu0 %v1936
        %1945 = vmatprep.subr.mxu0 0.0
        %1946 = vmatpush1.msra.mxu0 0.0
        %1947 = vmatprep.subr.mxu0 0.0
        %1948 = vmatpush1.msra.mxu0 0.0
        %1949 = vmatprep.subr.mxu0 0.0
        %1950 = vmatpush1.msra.mxu0 0.0
        %1951 = vmatprep.subr.mxu0 0.0
        %1952 = vmatpush1.msra.mxu0 0.0
        %1953 = vmatprep.subr.mxu0 0.0
        %1954 = vmatpush1.msra.mxu0 0.0
        %1955 = vmatprep.subr.mxu0 0.0
        %1956 = vmatpush1.msra.mxu0 0.0
        %1957 = vmatprep.subr.mxu0 0.0
        %1958 = vmatpush1.msra.mxu0 0.0
        %1959 = vmatprep.subr.mxu0 0.0
        %1960 = vmatpush1.msra.mxu0 0.0
        %1961 = vmatprep.subr.mxu0 0.0
        %1962 = vmatpush1.msra.mxu0 0.0
        %1963 = vmatprep.subr.mxu0 0.0
        %1964 = vmatpush1.msra.mxu0 0.0
        %1965 = vmatprep.subr.mxu0 0.0
        %1966 = vmatpush1.msra.mxu0 0.0
        %1967 = vmatprep.subr.mxu0 0.0
        %1968 = vmatpush1.msra.mxu0 0.0
        %1969 = vmatprep.subr.mxu0 0.0
        %1970 = vmatpush1.msra.mxu0 0.0
        %1971 = vmatprep.subr.mxu0 0.0
        %1972 = vmatpush1.msra.mxu0 0.0
        %1973 = vmatprep.subr.mxu0 0.0
        %1974 = vmatpush1.msra.mxu0 0.0
        %1975 = vmatprep.subr.mxu0 0.0
        %1976 = vmatpush1.msra.mxu0 0.0
        %1977 = vmatprep.subr.mxu0 0.0
        %1978 = vmatpush1.msra.mxu0 0.0
        %1979 = vmatprep.subr.mxu0 0.0
        %1980 = vmatpush1.msra.mxu0 0.0
        %1981 = vmatprep.subr.mxu0 0.0
        %1982 = vmatpush1.msra.mxu0 0.0
        %1983 = vmatprep.subr.mxu0 0.0
        %1984 = vmatpush1.msra.mxu0 0.0
        %1985 = vmatprep.subr.mxu0 0.0
        %1986 = vmatpush1.msra.mxu0 0.0
        %1987 = vmatprep.subr.mxu0 0.0
        %1988 = vmatpush1.msra.mxu0 0.0
        %1989 = vmatprep.subr.mxu0 0.0
        %1990 = vmatpush1.msra.mxu0 0.0
        %1991 = vmatprep.subr.mxu0 0.0
        %1992 = vmatpush1.msra.mxu0 0.0
        %1993 = vmatprep.subr.mxu0 0.0
        %1994 = vmatpush1.msra.mxu0 0.0
        %1995 = vmatprep.subr.mxu0 0.0
        %1996 = vmatpush1.msra.mxu0 0.0
        %1997 = vmatprep.subr.mxu0 0.0
        %1998 = vmatpush1.msra.mxu0 0.0
        %1999 = vmatprep.subr.mxu0 0.0
        %2000 = vmatpush1.msra.mxu0 0.0
        %2001 = vmatprep.subr.mxu0 0.0
        %2002 = vmatpush1.msra.mxu0 0.0
        %2003 = vmatprep.subr.mxu0 0.0
        %2004 = vmatpush1.msra.mxu0 0.0
        %2005 = vmatprep.subr.mxu0 0.0
        %2006 = vmatpush1.msra.mxu0 0.0
        %2007 = vmatprep.mubr.f32.mxu0 0.0
        %2008 = vmatmul.mubr.f32.gmra.mrb[0].mxu0 %v1941
        %v2009 = vpop.f32.mrb[0].mxu0
        %v2010 = vadd.f32 0.0, %v2009
        %v2011 = vpop.f32.mrb[0].mxu0
        %v2012 = vadd.f32 0.0, %v2011
        %2013 = vdwg.mxu0
        %v2014 = vadd.f32 %v1928, %v2010
        %v2015 = vadd.f32 %v1929, %v2012
        %v2016 = vld [vmem:[%s6] sm:$0xff]
        %2018 = vset.pattern.permute.xlu0 0
        %2019 = vperm.xlu0 %2018, %v2016
        %v2020 = vpop.permute.xlu0 %2019
        %v2022 = vmul.f32 %v2014, %v2020
        %v2023 = vmul.f32 %v2015, %v2020
        %v2024 = vld [vmem:[%s7] sm:$0xff]
        %2026 = vset.pattern.permute.xlu0 0
        %2027 = vperm.xlu0 %2026, %v2024
        %v2028 = vpop.permute.xlu0 %2027
        %v2030 = vadd.f32 %v2022, %v2028
        %v2031 = vadd.f32 %v2023, %v2028
        %v2032 = vmax.f32 %v2030, 0.0
        %v2033 = vmax.f32 %v2031, 0.0
        %2034 = vst [vmem:[%s298] sm:$0xff] %v2032
        %2035 = vst [vmem:[%s298 + $0x8] sm:$0xff] %v2033
        %s2036 = sand.u32 %s203, 1
        %s2037 = scalar_lea.sflag [#allocation3], %s2036
        %s2038 = sand.u32 %s203, 1
        %s2039 = smul.addr %s2038, 16
        %s2040 = scalar_lea.vmem [#allocation2], %s2039
        // Predicated region
        $region53: #{tpu_custom_call.1} parent=51 // pred_check
          %p2041 = pneg %p213
        $region54: #{tpu_custom_call.1} parent=51 // pred_check_branch
          %2043 = sbr.rel (%p2041) target = $region56
        $region55: #{tpu_custom_call.1} parent=51 // pred_region
          %s2045 = ssub.s32 256, 256
          %2046 = vsyncadd %s2037, %s2045
          %s2047 = smul.addr %s22, 2
          %s2048 = smul.addr %s2047, 128
          %s2049 = scalar_lea.hbm %s8, %s2048
          %s2051 = sshll.u32 %s2040, 4
          %s2052 = int_to_ptr.vmem [resolvable:$true] %s2051
          %2054 = dma.vmem_to_hbm [thread:$0]  %s2052, 256, %s2049, %s2037
        $region56: #{tpu_custom_call.1} parent=51 // pred_fallthru
          _
      $region52: #{tpu_custom_call.1} parent=5 // pred_fallthru
        _
      %p2055 = scmp.le.s32.totalorder 2, %s17
      // Predicated region
      $region57: #{tpu_custom_call.1} parent=5 // pred_check
        %p2056 = pneg %p2055
      $region58: #{tpu_custom_call.1} parent=5 // pred_check_branch
        %2058 = sbr.rel (%p2056) target = $region60
      $region59: #{tpu_custom_call.1} parent=5 // pred_region
        %s2059 = ssub.s32 %s17, 2
        // Predicated region
        $region61: #{tpu_custom_call.1} parent=59 // pred_check
          %p2060 = pneg %p219
        $region62: #{tpu_custom_call.1} parent=59 // pred_check_branch
          %2062 = sbr.rel (%p2060) target = $region64
        $region63: #{tpu_custom_call.1} parent=59 // pred_region
          %s2063 = sand.u32 %s204, 1
          %s2064 = scalar_lea.sflag [#allocation3], %s2063
          %s2065 = sand.u32 %s204, 1
          %s2066 = smul.addr %s2065, 16
          %s2067 = scalar_lea.vmem [#allocation2], %s2066
          %2068 = dma.done %s2064, 256
        $region64: #{tpu_custom_call.1} parent=59 // pred_fallthru
          _
      $region60: #{tpu_custom_call.1} parent=5 // pred_fallthru
        _
    $region6: #{tpu_custom_call.1} parent=1 // loop_footer
      %s21 = sadd.s32 1, %s17
    $region7: #{tpu_custom_call.1} parent=1 // loop_footer_branch
      %16 = sbr.rel target = $region3
    $region8: #{tpu_custom_call.1} parent=1 // loop_exit
      _
    %2069 = vsyncpa [#allocation3], 1
    %s2070 = scalar_lea.sflag [#allocation3], 1
    %2071 = vsyncpa %s2070, 1

</llo_original>
